<compile_context>
chip_gen: v6e
topology: v6e:2x2x1
jax: 0.10.0
libtpu: 0.0.40
codegen_flags: <defaults>
</compile_context>

<pallas_src>
import functools

import jax
import jax.numpy as jnp
from jax import lax
from jax.experimental import pallas as pl
from jax.experimental.pallas import tpu as pltpu


def _round_up(x: int, m: int) -> int:
    return (x + m - 1) // m * m


def _default_tiles():
    """Per-generation tile sizes (perf review): v5e 128x2048, v6e 256x4096,
    v7x / unknown 256x2048 (v7x has half the VMEM of v6e)."""
    try:
        kind = jax.devices()[0].device_kind.lower()
    except Exception:
        kind = ""
    if "v5e" in kind or "v5 lite" in kind or "v5litepod" in kind:
        return 128, 2048
    if "v6" in kind:
        return 256, 4096
    return 256, 2048


def _vmem_budget(tm: int, tv: int, kdim: int) -> int:
    """Scoped-VMEM limit sized to the actual tile budget (+headroom), capped below
    physical VMEM."""
    try:
        phys = pltpu.get_tpu_info().vmem_capacity_bytes
    except Exception:
        phys = 64 << 20  # be conservative (v7x physical VMEM per TC)
    need = (2 * kdim * tv * 2          # bf16 weight tiles, double-buffered
            + 2 * tm * kdim * 4        # f32 activation tiles, double-buffered
            + 2 * 2 * tv * 4           # bias tiles
            + 6 * tm * tv * 4          # logits tile + elementwise temporaries
            + 16 * tm * 128 * 4)       # (tm,1) scratch / outputs (lane-padded)
    return max(32 << 20, min(need + (16 << 20), int(phys * 0.9)))


# ---------------------------------------------------------------------------
# Fused kernel: decoder projection + online per-row loss statistics
#   grid = (row_tiles, vocab_tiles); rows "parallel", vocab "arbitrary" (innermost)
# ---------------------------------------------------------------------------
def _fused_kernel(emb_ref, e1_ref, e2_ref, w_emb_ref, w_e1_ref, w_e2_ref,
                  bias_ref, tgt_ref,
                  gen_ref, logp_ref, pmin_ref,
                  m_sc, z_sc, rmin_sc, g_sc, amax_sc,
                  *, tv, vocab):
    k = pl.program_id(1)
    nk = pl.num_programs(1)

    # ---- init online accumulators at the first vocab tile of this row tile ----
    @pl.when(k == 0)
    def _():
        m_sc[...] = jnp.full_like(m_sc, -jnp.inf)
        z_sc[...] = jnp.zeros_like(z_sc)
        rmin_sc[...] = jnp.full_like(rmin_sc, jnp.inf)
        g_sc[...] = jnp.zeros_like(g_sc)
        amax_sc[...] = jnp.zeros_like(amax_sc)

    # ---- decoder projection for this vocab tile: three K-chunks (emb/elmo1/elmo2),
    #      bf16 on the MXU, f32 accumulation.  The concatenated feature tensor never
    #      exists; activations are cast to bf16 in-kernel. ----
    acc = jnp.dot(emb_ref[...].astype(jnp.bfloat16), w_emb_ref[...],
                  preferred_element_type=jnp.float32)
    acc = acc + jnp.dot(e1_ref[...].astype(jnp.bfloat16), w_e1_ref[...],
                        preferred_element_type=jnp.float32)
    acc = acc + jnp.dot(e2_ref[...].astype(jnp.bfloat16), w_e2_ref[...],
                        preferred_element_type=jnp.float32)
    # Padded vocab columns carry a -1e30 bias: they never win max/argmax and
    # contribute exp(.)==0 to the denominator -> no masked copy of the logits needed.
    logits = acc + bias_ref[...]                              # (tm, tv) f32

    gcol = k * tv + lax.broadcasted_iota(jnp.int32, (1, tv), 1)   # (1, tv) global cols

    # ---- online max / softmax denominator ----
    tmax = jnp.max(logits, axis=-1, keepdims=True)            # (tm, 1)
    m_old = m_sc[...]
    m_new = jnp.maximum(m_old, tmax)

    # online argmax: first maximal global column.  Tiles are visited in ascending
    # column order, so on an exact tie the earlier stored index is kept.
    tidx = jnp.min(jnp.where(logits == tmax, gcol, jnp.int32(2147483647)),
                   axis=-1, keepdims=True)
    amax_sc[...] = jnp.where(tmax > m_old, tidx, amax_sc[...])

    z_sc[...] = z_sc[...] * jnp.exp(m_old - m_new) + \
        jnp.sum(jnp.exp(logits - m_new), axis=-1, keepdims=True)
    m_sc[...] = m_new

    # ---- per-row minimum logit (exclude padded columns, which sit at -1e30) ----
    if vocab % tv == 0:                      # static: no padded columns anywhere
        rmin_t = jnp.min(logits, axis=-1, keepdims=True)
    else:
        rmin_t = jnp.min(jnp.where(gcol < vocab, logits, jnp.float32(jnp.inf)),
                         axis=-1, keepdims=True)
    rmin_sc[...] = jnp.minimum(rmin_sc[...], rmin_t)

    # ---- gathered target logit (exactly one global column matches per row) ----
    g_sc[...] = g_sc[...] + jnp.sum(
        jnp.where(gcol == tgt_ref[...], logits, 0.0), axis=-1, keepdims=True)

    # ---- finalize after the last vocab tile ----
    @pl.when(k == nk - 1)
    def _():
        gen_ref[...] = amax_sc[...]                            # int32 argmax ids
        log_z = jnp.log(z_sc[...])
        logp_ref[...] = g_sc[...] - m_sc[...] - log_z          # log softmax(target)
        inv_z = pl.reciprocal(z_sc[...], approx=True)          # EUP slot
        pmin_ref[...] = jnp.exp(rmin_sc[...] - m_sc[...]) * inv_z


def fused_decoder_loss_stats(emb, e1, e2, w_emb, w_e1, w_e2, bias, tgt,
                             *, vocab, tm, tv, vmem_limit_bytes):
    bt_pad = emb.shape[0]
    v_pad = w_emb.shape[1]
    n_i = bt_pad // tm
    n_k = v_pad // tv

    kern = functools.partial(_fused_kernel, tv=tv, vocab=vocab)

    in_specs = [
        pl.BlockSpec((tm, emb.shape[1]), lambda i, k: (i, 0)),      # emb rows (f32)
        pl.BlockSpec((tm, e1.shape[1]), lambda i, k: (i, 0)),       # elmo1 rows (f32)
        pl.BlockSpec((tm, e2.shape[1]), lambda i, k: (i, 0)),       # elmo2 rows (f32)
        pl.BlockSpec((w_emb.shape[0], tv), lambda i, k: (0, k)),    # W_emb vocab tile (bf16)
        pl.BlockSpec((w_e1.shape[0], tv), lambda i, k: (0, k)),     # W_elmo1 vocab tile
        pl.BlockSpec((w_e2.shape[0], tv), lambda i, k: (0, k)),     # W_elmo2 vocab tile
        pl.BlockSpec((1, tv), lambda i, k: (0, k)),                 # bias vocab tile
        pl.BlockSpec((tm, 1), lambda i, k: (i, 0)),                 # targets
    ]
    out_specs = (
        pl.BlockSpec((tm, 1), lambda i, k: (i, 0)),                 # argmax id (int32)
        pl.BlockSpec((tm, 1), lambda i, k: (i, 0)),                 # log softmax(target)
        pl.BlockSpec((tm, 1), lambda i, k: (i, 0)),                 # row-min probability
    )
    out_shape = (
        jax.ShapeDtypeStruct((bt_pad, 1), jnp.int32),
        jax.ShapeDtypeStruct((bt_pad, 1), jnp.float32),
        jax.ShapeDtypeStruct((bt_pad, 1), jnp.float32),
    )
    scratch_shapes = [
        pltpu.VMEM((tm, 1), jnp.float32),   # running max
        pltpu.VMEM((tm, 1), jnp.float32),   # running sum-exp
        pltpu.VMEM((tm, 1), jnp.float32),   # running min logit
        pltpu.VMEM((tm, 1), jnp.float32),   # gathered target logit
        pltpu.VMEM((tm, 1), jnp.int32),     # running argmax id
    ]
    return pl.pallas_call(
        kern,
        grid=(n_i, n_k),
        in_specs=in_specs,
        out_specs=out_specs,
        out_shape=out_shape,
        scratch_shapes=scratch_shapes,
        compiler_params=pltpu.CompilerParams(
            dimension_semantics=("parallel", "arbitrary"),   # rows parallel, vocab reduction
            vmem_limit_bytes=vmem_limit_bytes),
    )(emb, e1, e2, w_emb, w_e1, w_e2, bias, tgt)


# ---------------------------------------------------------------------------
# One-time parameter preparation (hoisted out of the per-call hot path)
# ---------------------------------------------------------------------------
def prepare_params(params, *, tm_pref=None, tv_pref=None):
    tm_d, tv_d = _default_tiles()
    tm_pref = tm_d if tm_pref is None else tm_pref
    tv_pref = tv_d if tv_pref is None else tv_pref

    emb_table = params["emb_table"]
    w = params["dec_w"]                         # (E + 2*D1, V) f32
    b = params["dec_b"]
    E = emb_table.shape[1]
    D1 = params["elmo1"].shape[-1]
    V = w.shape[1]

    tv = min(tv_pref, _round_up(V, 128))        # lane-aligned vocab tile
    v_pad = _round_up(V, tv)

    def padc(x, cols):
        return jnp.pad(x, ((0, 0), (0, cols - x.shape[1])))

    # split the decoder weight row-wise -> no concatenated feats tensor, ever
    w_emb = padc(w[:E], v_pad).astype(jnp.bfloat16)
    w_e1 = padc(w[E:E + D1], v_pad).astype(jnp.bfloat16)
    w_e2 = padc(w[E + D1:E + 2 * D1], v_pad).astype(jnp.bfloat16)

    # padded vocab columns get a -1e30 bias (kills max/argmax/sum-exp in-kernel
    # without any masked logits copy)
    bias = jnp.full((1, v_pad), -1e30, jnp.float32)
    bias = bias.at[:, :V].set(jnp.reshape(b, (1, V)).astype(jnp.float32))

    return {
        "emb_table": emb_table,
        "elmo1": params["elmo1"], "elmo2": params["elmo2"],
        "w_emb": w_emb, "w_e1": w_e1, "w_e2": w_e2, "bias": bias,
        "E": E, "D1": D1, "V": V, "V_pad": v_pad,
        "tm_pref": tm_pref, "tv": tv,
    }


# ---------------------------------------------------------------------------
# Forward wrapper: embedding gather + row padding (plain JAX glue), fused Pallas
# kernel, then a tiny plain-JAX epilogue over (B*T,) scalars.
# ---------------------------------------------------------------------------
def answer_generator_forward(span, a_vec, prep):
    B, T = span.shape
    E, D1, V = prep["E"], prep["D1"], prep["V"]
    tv = prep["tv"]

    BT = B * T
    # shrink the row tile for small B*T so padding rows don't dominate MXU work
    tm = min(prep["tm_pref"], _round_up(BT, 8))
    bt_pad = _round_up(BT, tm)

    def pad_rows(x):
        return jnp.pad(x, ((0, bt_pad - x.shape[0]), (0, 0)))

    # word embeddings (gather) — plain JAX glue; activations stay f32, cast in-kernel
    emb = pad_rows(prep["emb_table"][span].reshape(BT, E))
    e1 = pad_rows(prep["elmo1"].reshape(BT, D1))
    e2 = pad_rows(prep["elmo2"].reshape(BT, D1))
    tgt = jnp.pad(a_vec.reshape(BT).astype(jnp.int32),
                  (0, bt_pad - BT)).reshape(bt_pad, 1)

    vmem_limit = _vmem_budget(tm, tv, E + 2 * D1)

    gen_idx, log_p_tgt, p_row_min = fused_decoder_loss_stats(
        emb, e1, e2, prep["w_emb"], prep["w_e1"], prep["w_e2"], prep["bias"], tgt,
        vocab=V, tm=tm, tv=tv, vmem_limit_bytes=vmem_limit)

    # --- epilogue over (B*T,) scalars in plain JAX (drops the 'valid' stream and
    #     the fixed-cost second pallas_call, per the perf review) ---
    log_pg = log_p_tgt[:BT, 0].reshape(B, T)[:, 1:].reshape(-1)   # the [:, 1:, :] slice
    p_min = p_row_min[:BT, 0].reshape(B, T)[:, 1:].reshape(-1)
    tgt_l = a_vec[:, 1:].reshape(-1)

    eps = 1e-8
    # torch: torch.min(p[p != 0]) — exclude exactly-zero (underflowed) entries
    p_min = jnp.where(p_min > 0.0, p_min, jnp.float32(jnp.inf))
    min_nz = jnp.min(p_min)
    p = (1.0 - eps) * jnp.exp(log_pg) + eps * min_nz
    valid = tgt_l != 0                                   # NLLLoss ignore_index=0
    n_valid = jnp.sum(valid.astype(jnp.float32))
    # NOTE: all-ignored batch (n_valid == 0) yields NaN, matching torch NLLLoss.
    loss = -jnp.sum(jnp.where(valid, jnp.log(p), 0.0)) / n_valid

    gen_out = gen_idx[:BT, 0].reshape(B, T).astype(jnp.float32)   # torch gen_out is f32
    return loss, gen_out


if __name__ == "__main__":
    key = jax.random.PRNGKey(0)
    B, T = 2, 8                 # batch, target_iter
    emb_size = 32
    full_vocab_size = 64
    elmo_dim = 1024             # module concatenates emb_size + 2048 (two 1024-d reps)

    k1, k2, k3, k4, k5, k6 = jax.random.split(key, 6)
    raw_params = {
        "emb_table": 0.1 * jax.random.normal(k1, (full_vocab_size, emb_size), jnp.float32),
        # TODO(synk): ELMo pretrained model has no Pallas equivalent; deterministic stand-ins.
        "elmo1": 0.1 * jax.random.normal(k2, (B, T, elmo_dim), jnp.float32),
        "elmo2": 0.1 * jax.random.normal(k3, (B, T, elmo_dim), jnp.float32),
        # TODO(synk): Decoder internals unknown; stand-in is a linear projection to vocab logits.
        "dec_w": 0.02 * jax.random.normal(
            k4, (emb_size + 2 * elmo_dim, full_vocab_size), jnp.float32),
        "dec_b": jnp.zeros((1, full_vocab_size), jnp.float32),
    }

    span = jax.random.randint(k5, (B, T), 1, full_vocab_size, dtype=jnp.int32)
    a_vec = jax.random.randint(k6, (B, T), 0, full_vocab_size, dtype=jnp.int32)

    prep = prepare_params(raw_params)       # one-time weight prep (hoisted off the hot path)
    loss, gen_out = answer_generator_forward(span, a_vec, prep)
    jax.block_until_ready((loss, gen_out))
    assert gen_out.shape == (B, T) and gen_out.dtype == jnp.float32
    assert loss.shape == () and bool(jnp.isfinite(loss))
    print("KERNEL_OK")
</pallas_src>

<mosaic_0001>
module attributes {stable_mosaic.version = 11 : i64} {
  func.func @_fused_kernel(%arg0: i32, %arg1: i32, %arg2: memref<16x32xf32, #tpu.memory_space<vmem>>, %arg3: memref<16x1024xf32, #tpu.memory_space<vmem>>, %arg4: memref<16x1024xf32, #tpu.memory_space<vmem>>, %arg5: memref<32x128xbf16, #tpu.memory_space<vmem>>, %arg6: memref<1024x128xbf16, #tpu.memory_space<vmem>>, %arg7: memref<1024x128xbf16, #tpu.memory_space<vmem>>, %arg8: memref<1x128xf32, #tpu.memory_space<vmem>>, %arg9: memref<16x1xi32, #tpu.memory_space<vmem>>, %arg10: memref<16x1xi32, #tpu.memory_space<vmem>>, %arg11: memref<16x1xf32, #tpu.memory_space<vmem>>, %arg12: memref<16x1xf32, #tpu.memory_space<vmem>>, %arg13: memref<16x1xf32, #tpu.memory_space<vmem>>, %arg14: memref<16x1xf32, #tpu.memory_space<vmem>>, %arg15: memref<16x1xf32, #tpu.memory_space<vmem>>, %arg16: memref<16x1xf32, #tpu.memory_space<vmem>>, %arg17: memref<16x1xi32, #tpu.memory_space<vmem>>) attributes {dimension_semantics = [#tpu.dimension_semantics<parallel>, #tpu.dimension_semantics<arbitrary>], iteration_bounds = array<i64: 1, 1>, scalar_prefetch = 0 : i64, scratch_operands = 5 : i64, tpu.core_type = #tpu.core_type<tc>, window_params = [{transform_indices = @transform_0, window_bounds = array<i64: 16, 32>}, {transform_indices = @transform_1, window_bounds = array<i64: 16, 1024>}, {transform_indices = @transform_2, window_bounds = array<i64: 16, 1024>}, {transform_indices = @transform_3, window_bounds = array<i64: 32, 128>}, {transform_indices = @transform_4, window_bounds = array<i64: 1024, 128>}, {transform_indices = @transform_5, window_bounds = array<i64: 1024, 128>}, {transform_indices = @transform_6, window_bounds = array<i64: 1, 128>}, {transform_indices = @transform_7, window_bounds = array<i64: 16, 1>}, {transform_indices = @transform_8, window_bounds = array<i64: 16, 1>}, {transform_indices = @transform_9, window_bounds = array<i64: 16, 1>}, {transform_indices = @transform_10, window_bounds = array<i64: 16, 1>}]} {
    %c0_i32 = arith.constant 0 : i32
    %0 = arith.cmpi eq, %arg1, %c0_i32 : i32
    %1 = arith.extui %0 : i1 to i32
    %c0_i32_0 = arith.constant 0 : i32
    %2 = arith.cmpi ne, %1, %c0_i32_0 : i32
    scf.if %2 {
      %cst_47 = arith.constant 0xFF800000 : f32
      %77 = vector.broadcast %cst_47 : f32 to vector<16x1xf32>
      %c0_48 = arith.constant 0 : index
      %c0_49 = arith.constant 0 : index
      %78 = vector.load %arg13[%c0_48, %c0_49] : memref<16x1xf32, #tpu.memory_space<vmem>>, vector<16x1xf32>
      tpu.vector_store %arg13[%c0_48, %c0_49], %77 {strides = array<i32>} : memref<16x1xf32, #tpu.memory_space<vmem>>, vector<16x1xf32>,
      %cst_50 = arith.constant 0.000000e+00 : f32
      %79 = vector.broadcast %cst_50 : f32 to vector<16x1xf32>
      %c0_51 = arith.constant 0 : index
      %c0_52 = arith.constant 0 : index
      %80 = vector.load %arg14[%c0_51, %c0_52] : memref<16x1xf32, #tpu.memory_space<vmem>>, vector<16x1xf32>
      tpu.vector_store %arg14[%c0_51, %c0_52], %79 {strides = array<i32>} : memref<16x1xf32, #tpu.memory_space<vmem>>, vector<16x1xf32>,
      %cst_53 = arith.constant 0x7F800000 : f32
      %81 = vector.broadcast %cst_53 : f32 to vector<16x1xf32>
      %c0_54 = arith.constant 0 : index
      %c0_55 = arith.constant 0 : index
      %82 = vector.load %arg15[%c0_54, %c0_55] : memref<16x1xf32, #tpu.memory_space<vmem>>, vector<16x1xf32>
      tpu.vector_store %arg15[%c0_54, %c0_55], %81 {strides = array<i32>} : memref<16x1xf32, #tpu.memory_space<vmem>>, vector<16x1xf32>,
      %cst_56 = arith.constant 0.000000e+00 : f32
      %83 = vector.broadcast %cst_56 : f32 to vector<16x1xf32>
      %c0_57 = arith.constant 0 : index
      %c0_58 = arith.constant 0 : index
      %84 = vector.load %arg16[%c0_57, %c0_58] : memref<16x1xf32, #tpu.memory_space<vmem>>, vector<16x1xf32>
      tpu.vector_store %arg16[%c0_57, %c0_58], %83 {strides = array<i32>} : memref<16x1xf32, #tpu.memory_space<vmem>>, vector<16x1xf32>,
      %c0_i32_59 = arith.constant 0 : i32
      %85 = vector.broadcast %c0_i32_59 : i32 to vector<16x1xi32>
      %c0_60 = arith.constant 0 : index
      %c0_61 = arith.constant 0 : index
      %86 = vector.load %arg17[%c0_60, %c0_61] : memref<16x1xi32, #tpu.memory_space<vmem>>, vector<16x1xi32>
      tpu.vector_store %arg17[%c0_60, %c0_61], %85 {strides = array<i32>} : memref<16x1xi32, #tpu.memory_space<vmem>>, vector<16x1xi32>,
    } else {
    }
    %c0 = arith.constant 0 : index
    %c0_1 = arith.constant 0 : index
    %3 = vector.load %arg2[%c0, %c0_1] : memref<16x32xf32, #tpu.memory_space<vmem>>, vector<16x32xf32>
    %4 = arith.truncf %3 : vector<16x32xf32> to vector<16x32xbf16>
    %c0_2 = arith.constant 0 : index
    %c0_3 = arith.constant 0 : index
    %5 = vector.load %arg5[%c0_2, %c0_3] : memref<32x128xbf16, #tpu.memory_space<vmem>>, vector<32x128xbf16>
    %cst = arith.constant dense<0.000000e+00> : vector<16x128xf32>
    %6 = tpu.matmul %4, %5, %cst {dimension_numbers = #tpu.dot_dimension_numbers<[1], [0], [0], [1], [0, 0, 1, 1], [], []>} : vector<16x32xbf16>, vector<32x128xbf16>, vector<16x128xf32> -> vector<16x128xf32>
    %c0_4 = arith.constant 0 : index
    %c0_5 = arith.constant 0 : index
    %7 = vector.load %arg3[%c0_4, %c0_5] : memref<16x1024xf32, #tpu.memory_space<vmem>>, vector<16x1024xf32>
    %8 = arith.truncf %7 : vector<16x1024xf32> to vector<16x1024xbf16>
    %c0_6 = arith.constant 0 : index
    %c0_7 = arith.constant 0 : index
    %9 = vector.load %arg6[%c0_6, %c0_7] : memref<1024x128xbf16, #tpu.memory_space<vmem>>, vector<1024x128xbf16>
    %cst_8 = arith.constant dense<0.000000e+00> : vector<16x128xf32>
    %10 = tpu.matmul %8, %9, %cst_8 {dimension_numbers = #tpu.dot_dimension_numbers<[1], [0], [0], [1], [0, 0, 1, 1], [], []>} : vector<16x1024xbf16>, vector<1024x128xbf16>, vector<16x128xf32> -> vector<16x128xf32>
    %11 = arith.addf %6, %10 : vector<16x128xf32>
    %c0_9 = arith.constant 0 : index
    %c0_10 = arith.constant 0 : index
    %12 = vector.load %arg4[%c0_9, %c0_10] : memref<16x1024xf32, #tpu.memory_space<vmem>>, vector<16x1024xf32>
    %13 = arith.truncf %12 : vector<16x1024xf32> to vector<16x1024xbf16>
    %c0_11 = arith.constant 0 : index
    %c0_12 = arith.constant 0 : index
    %14 = vector.load %arg7[%c0_11, %c0_12] : memref<1024x128xbf16, #tpu.memory_space<vmem>>, vector<1024x128xbf16>
    %cst_13 = arith.constant dense<0.000000e+00> : vector<16x128xf32>
    %15 = tpu.matmul %13, %14, %cst_13 {dimension_numbers = #tpu.dot_dimension_numbers<[1], [0], [0], [1], [0, 0, 1, 1], [], []>} : vector<16x1024xbf16>, vector<1024x128xbf16>, vector<16x128xf32> -> vector<16x128xf32>
    %16 = arith.addf %11, %15 : vector<16x128xf32>
    %c0_14 = arith.constant 0 : index
    %c0_15 = arith.constant 0 : index
    %17 = vector.load %arg8[%c0_14, %c0_15] : memref<1x128xf32, #tpu.memory_space<vmem>>, vector<1x128xf32>
    %18 = vector.broadcast %17 : vector<1x128xf32> to vector<16x128xf32>
    %19 = arith.addf %16, %18 : vector<16x128xf32>
    %c128_i32 = arith.constant 128 : i32
    %20 = arith.muli %arg1, %c128_i32 : i32
    %21 = tpu.iota {dimensions = array<i32: 1>} : vector<1x128xi32>
    %22 = vector.broadcast %20 : i32 to vector<1x128xi32>
    %23 = arith.addi %22, %21 : vector<1x128xi32>
    %cst_16 = arith.constant dense<0xFF800000> : vector<16xf32>
    %24 = vector.multi_reduction <maximumf>, %19, %cst_16 [1] : vector<16x128xf32> to vector<16xf32>
    %25 = vector.shape_cast %24 : vector<16xf32> to vector<16x1xf32>
    %c0_17 = arith.constant 0 : index
    %c0_18 = arith.constant 0 : index
    %26 = vector.load %arg13[%c0_17, %c0_18] : memref<16x1xf32, #tpu.memory_space<vmem>>, vector<16x1xf32>
    %27 = arith.maximumf %26, %25 : vector<16x1xf32>
    %28 = vector.broadcast %25 : vector<16x1xf32> to vector<16x128xf32>
    %29 = arith.cmpf oeq, %19, %28 : vector<16x128xf32>
    %c2147483647_i32 = arith.constant 2147483647 : i32
    %30 = vector.shape_cast %23 : vector<1x128xi32> to vector<1x128xi32>
    %31 = vector.broadcast %30 : vector<1x128xi32> to vector<16x128xi32>
    %32 = vector.broadcast %c2147483647_i32 : i32 to vector<16x128xi32>
    %33 = arith.select %29, %31, %32 : vector<16x128xi1>, vector<16x128xi32>
    %cst_19 = arith.constant dense<2147483647> : vector<16xi32>
    %34 = vector.multi_reduction <minsi>, %33, %cst_19 [1] : vector<16x128xi32> to vector<16xi32>
    %35 = vector.shape_cast %34 : vector<16xi32> to vector<16x1xi32>
    %36 = arith.cmpf ogt, %25, %26 : vector<16x1xf32>
    %c0_20 = arith.constant 0 : index
    %c0_21 = arith.constant 0 : index
    %37 = vector.load %arg17[%c0_20, %c0_21] : memref<16x1xi32, #tpu.memory_space<vmem>>, vector<16x1xi32>
    %38 = arith.select %36, %35, %37 : vector<16x1xi1>, vector<16x1xi32>
    %c0_22 = arith.constant 0 : index
    %c0_23 = arith.constant 0 : index
    %39 = vector.load %arg17[%c0_22, %c0_23] : memref<16x1xi32, #tpu.memory_space<vmem>>, vector<16x1xi32>
    tpu.vector_store %arg17[%c0_22, %c0_23], %38 {strides = array<i32>} : memref<16x1xi32, #tpu.memory_space<vmem>>, vector<16x1xi32>,
    %c0_24 = arith.constant 0 : index
    %c0_25 = arith.constant 0 : index
    %40 = vector.load %arg14[%c0_24, %c0_25] : memref<16x1xf32, #tpu.memory_space<vmem>>, vector<16x1xf32>
    %41 = arith.subf %26, %27 : vector<16x1xf32>
    %42 = math.exp %41 : vector<16x1xf32>
    %43 = arith.mulf %40, %42 : vector<16x1xf32>
    %44 = vector.broadcast %27 : vector<16x1xf32> to vector<16x128xf32>
    %45 = arith.subf %19, %44 : vector<16x128xf32>
    %46 = math.exp %45 : vector<16x128xf32>
    %cst_26 = arith.constant dense<0.000000e+00> : vector<16xf32>
    %47 = vector.multi_reduction <add>, %46, %cst_26 [1] : vector<16x128xf32> to vector<16xf32>
    %48 = vector.shape_cast %47 : vector<16xf32> to vector<16x1xf32>
    %49 = arith.addf %43, %48 : vector<16x1xf32>
    %c0_27 = arith.constant 0 : index
    %c0_28 = arith.constant 0 : index
    %50 = vector.load %arg14[%c0_27, %c0_28] : memref<16x1xf32, #tpu.memory_space<vmem>>, vector<16x1xf32>
    tpu.vector_store %arg14[%c0_27, %c0_28], %49 {strides = array<i32>} : memref<16x1xf32, #tpu.memory_space<vmem>>, vector<16x1xf32>,
    %c0_29 = arith.constant 0 : index
    %c0_30 = arith.constant 0 : index
    %51 = vector.load %arg13[%c0_29, %c0_30] : memref<16x1xf32, #tpu.memory_space<vmem>>, vector<16x1xf32>
    tpu.vector_store %arg13[%c0_29, %c0_30], %27 {strides = array<i32>} : memref<16x1xf32, #tpu.memory_space<vmem>>, vector<16x1xf32>,
    %c64_i32 = arith.constant 64 : i32
    %52 = vector.broadcast %c64_i32 : i32 to vector<1x128xi32>
    %53 = arith.cmpi slt, %23, %52 : vector<1x128xi32>
    %cst_31 = arith.constant 0x7F800000 : f32
    %54 = vector.shape_cast %53 : vector<1x128xi1> to vector<1x128xi1>
    %55 = vector.broadcast %54 : vector<1x128xi1> to vector<16x128xi1>
    %56 = vector.broadcast %cst_31 : f32 to vector<16x128xf32>
    %57 = arith.select %55, %19, %56 : vector<16x128xi1>, vector<16x128xf32>
    %cst_32 = arith.constant dense<0x7F800000> : vector<16xf32>
    %58 = vector.multi_reduction <minimumf>, %57, %cst_32 [1] : vector<16x128xf32> to vector<16xf32>
    %59 = vector.shape_cast %58 : vector<16xf32> to vector<16x1xf32>
    %c0_33 = arith.constant 0 : index
    %c0_34 = arith.constant 0 : index
    %60 = vector.load %arg15[%c0_33, %c0_34] : memref<16x1xf32, #tpu.memory_space<vmem>>, vector<16x1xf32>
    %61 = arith.minimumf %60, %59 : vector<16x1xf32>
    %c0_35 = arith.constant 0 : index
    %c0_36 = arith.constant 0 : index
    %62 = vector.load %arg15[%c0_35, %c0_36] : memref<16x1xf32, #tpu.memory_space<vmem>>, vector<16x1xf32>
    tpu.vector_store %arg15[%c0_35, %c0_36], %61 {strides = array<i32>} : memref<16x1xf32, #tpu.memory_space<vmem>>, vector<16x1xf32>,
    %c0_37 = arith.constant 0 : index
    %c0_38 = arith.constant 0 : index
    %63 = vector.load %arg16[%c0_37, %c0_38] : memref<16x1xf32, #tpu.memory_space<vmem>>, vector<16x1xf32>
    %c0_39 = arith.constant 0 : index
    %c0_40 = arith.constant 0 : index
    %64 = vector.load %arg9[%c0_39, %c0_40] : memref<16x1xi32, #tpu.memory_space<vmem>>, vector<16x1xi32>
    %65 = vector.broadcast %23 : vector<1x128xi32> to vector<16x128xi32>
    %66 = vector.broadcast %64 : vector<16x1xi32> to vector<16x128xi32>
    %67 = arith.cmpi eq, %65, %66 : vector<16x128xi32>
    %cst_41 = arith.constant 0.000000e+00 : f32
    %68 = vector.broadcast %cst_41 : f32 to vector<16x128xf32>
    %69 = arith.select %67, %19, %68 : vector<16x128xi1>, vector<16x128xf32>
    %cst_42 = arith.constant dense<0.000000e+00> : vector<16xf32>
    %70 = vector.multi_reduction <add>, %69, %cst_42 [1] : vector<16x128xf32> to vector<16xf32>
    %71 = vector.shape_cast %70 : vector<16xf32> to vector<16x1xf32>
    %72 = arith.addf %63, %71 : vector<16x1xf32>
    %c0_43 = arith.constant 0 : index
    %c0_44 = arith.constant 0 : index
    %73 = vector.load %arg16[%c0_43, %c0_44] : memref<16x1xf32, #tpu.memory_space<vmem>>, vector<16x1xf32>
    tpu.vector_store %arg16[%c0_43, %c0_44], %72 {strides = array<i32>} : memref<16x1xf32, #tpu.memory_space<vmem>>, vector<16x1xf32>,
    %c0_i32_45 = arith.constant 0 : i32
    %74 = arith.cmpi eq, %arg1, %c0_i32_45 : i32
    %75 = arith.extui %74 : i1 to i32
    %c0_i32_46 = arith.constant 0 : i32
    %76 = arith.cmpi ne, %75, %c0_i32_46 : i32
    scf.if %76 {
      %c0_47 = arith.constant 0 : index
      %c0_48 = arith.constant 0 : index
      %77 = vector.load %arg17[%c0_47, %c0_48] : memref<16x1xi32, #tpu.memory_space<vmem>>, vector<16x1xi32>
      %c0_49 = arith.constant 0 : index
      %c0_50 = arith.constant 0 : index
      %78 = vector.load %arg10[%c0_49, %c0_50] : memref<16x1xi32, #tpu.memory_space<vmem>>, vector<16x1xi32>
      tpu.vector_store %arg10[%c0_49, %c0_50], %77 {strides = array<i32>} : memref<16x1xi32, #tpu.memory_space<vmem>>, vector<16x1xi32>,
      %c0_51 = arith.constant 0 : index
      %c0_52 = arith.constant 0 : index
      %79 = vector.load %arg14[%c0_51, %c0_52] : memref<16x1xf32, #tpu.memory_space<vmem>>, vector<16x1xf32>
      %80 = math.log %79 : vector<16x1xf32>
      %c0_53 = arith.constant 0 : index
      %c0_54 = arith.constant 0 : index
      %81 = vector.load %arg16[%c0_53, %c0_54] : memref<16x1xf32, #tpu.memory_space<vmem>>, vector<16x1xf32>
      %c0_55 = arith.constant 0 : index
      %c0_56 = arith.constant 0 : index
      %82 = vector.load %arg13[%c0_55, %c0_56] : memref<16x1xf32, #tpu.memory_space<vmem>>, vector<16x1xf32>
      %83 = arith.subf %81, %82 : vector<16x1xf32>
      %84 = arith.subf %83, %80 : vector<16x1xf32>
      %c0_57 = arith.constant 0 : index
      %c0_58 = arith.constant 0 : index
      %85 = vector.load %arg11[%c0_57, %c0_58] : memref<16x1xf32, #tpu.memory_space<vmem>>, vector<16x1xf32>
      tpu.vector_store %arg11[%c0_57, %c0_58], %84 {strides = array<i32>} : memref<16x1xf32, #tpu.memory_space<vmem>>, vector<16x1xf32>,
      %c0_59 = arith.constant 0 : index
      %c0_60 = arith.constant 0 : index
      %86 = vector.load %arg14[%c0_59, %c0_60] : memref<16x1xf32, #tpu.memory_space<vmem>>, vector<16x1xf32>
      %87 = tpu.reciprocal %86 {approx = true} : vector<16x1xf32> -> vector<16x1xf32>
      %c0_61 = arith.constant 0 : index
      %c0_62 = arith.constant 0 : index
      %88 = vector.load %arg15[%c0_61, %c0_62] : memref<16x1xf32, #tpu.memory_space<vmem>>, vector<16x1xf32>
      %c0_63 = arith.constant 0 : index
      %c0_64 = arith.constant 0 : index
      %89 = vector.load %arg13[%c0_63, %c0_64] : memref<16x1xf32, #tpu.memory_space<vmem>>, vector<16x1xf32>
      %90 = arith.subf %88, %89 : vector<16x1xf32>
      %91 = math.exp %90 : vector<16x1xf32>
      %92 = arith.mulf %91, %87 : vector<16x1xf32>
      %c0_65 = arith.constant 0 : index
      %c0_66 = arith.constant 0 : index
      %93 = vector.load %arg12[%c0_65, %c0_66] : memref<16x1xf32, #tpu.memory_space<vmem>>, vector<16x1xf32>
      tpu.vector_store %arg12[%c0_65, %c0_66], %92 {strides = array<i32>} : memref<16x1xf32, #tpu.memory_space<vmem>>, vector<16x1xf32>,
    } else {
    }
    return
  }
  func.func @transform_0(%arg0: i32, %arg1: i32) -> (i32, i32) {
    %c0_i32 = arith.constant 0 : i32
    %c0_i32_0 = arith.constant 0 : i32
    return %arg0, %c0_i32 : i32, i32
  }
  func.func @transform_1(%arg0: i32, %arg1: i32) -> (i32, i32) {
    %c0_i32 = arith.constant 0 : i32
    %c0_i32_0 = arith.constant 0 : i32
    return %arg0, %c0_i32 : i32, i32
  }
  func.func @transform_2(%arg0: i32, %arg1: i32) -> (i32, i32) {
    %c0_i32 = arith.constant 0 : i32
    %c0_i32_0 = arith.constant 0 : i32
    return %arg0, %c0_i32 : i32, i32
  }
  func.func @transform_3(%arg0: i32, %arg1: i32) -> (i32, i32) {
    %c0_i32 = arith.constant 0 : i32
    %c0_i32_0 = arith.constant 0 : i32
    return %c0_i32, %arg1 : i32, i32
  }
  func.func @transform_4(%arg0: i32, %arg1: i32) -> (i32, i32) {
    %c0_i32 = arith.constant 0 : i32
    %c0_i32_0 = arith.constant 0 : i32
    return %c0_i32, %arg1 : i32, i32
  }
  func.func @transform_5(%arg0: i32, %arg1: i32) -> (i32, i32) {
    %c0_i32 = arith.constant 0 : i32
    %c0_i32_0 = arith.constant 0 : i32
    return %c0_i32, %arg1 : i32, i32
  }
  func.func @transform_6(%arg0: i32, %arg1: i32) -> (i32, i32) {
    %c0_i32 = arith.constant 0 : i32
    %c0_i32_0 = arith.constant 0 : i32
    return %c0_i32, %arg1 : i32, i32
  }
  func.func @transform_7(%arg0: i32, %arg1: i32) -> (i32, i32) {
    %c0_i32 = arith.constant 0 : i32
    %c0_i32_0 = arith.constant 0 : i32
    return %arg0, %c0_i32 : i32, i32
  }
  func.func @transform_8(%arg0: i32, %arg1: i32) -> (i32, i32) {
    %c0_i32 = arith.constant 0 : i32
    %c0_i32_0 = arith.constant 0 : i32
    return %arg0, %c0_i32 : i32, i32
  }
  func.func @transform_9(%arg0: i32, %arg1: i32) -> (i32, i32) {
    %c0_i32 = arith.constant 0 : i32
    %c0_i32_0 = arith.constant 0 : i32
    return %arg0, %c0_i32 : i32, i32
  }
  func.func @transform_10(%arg0: i32, %arg1: i32) -> (i32, i32) {
    %c0_i32 = arith.constant 0 : i32
    %c0_i32_0 = arith.constant 0 : i32
    return %arg0, %c0_i32 : i32, i32
  }
}

</mosaic_0001>

<llo_original>
// kernel: tpu_custom_call.1
$region0: #{tpu_custom_call.1}
  #allocation0 [shape = 'u32[]', space=smem, size = 0x4, offset = 0x4, fixed_abs, tag = 'smem constant byte address 0x4 - core index']
  #allocation1 [shape = 'u32[144,128]{1,0:T(1,128)}', space=vmem, size = 0x12000, scoped, tag = 'internal scratch']
  #allocation2 [shape = 'f32[16,1]{1,0:T(8,128)}', space=vmem, size = 0x2000, scoped, tag = 'scratch operand']
  #allocation3 [shape = 'f32[16,1]{1,0:T(8,128)}', space=vmem, size = 0x2000, scoped, tag = 'scratch operand']
  #allocation4 [shape = 'f32[16,1]{1,0:T(8,128)}', space=vmem, size = 0x2000, scoped, tag = 'scratch operand']
  #allocation5 [shape = 'f32[16,1]{1,0:T(8,128)}', space=vmem, size = 0x2000, scoped, tag = 'scratch operand']
  #allocation6 [shape = 's32[16,1]{1,0:T(8,128)}', space=vmem, size = 0x2000, scoped, tag = 'scratch operand']
  %s0 = inlined_call_operand.vmem [shape: f32[16,32], index: 0, kind: input, shape index: {}]
  %s1 = inlined_call_operand.hbm [shape: f32[16,1024], index: 1, kind: input, shape index: {}]
  %s2 = inlined_call_operand.hbm [shape: f32[16,1024], index: 2, kind: input, shape index: {}]
  %s3 = inlined_call_operand.hbm [shape: bf16[32,128], index: 3, kind: input, shape index: {}]
  %s4 = inlined_call_operand.hbm [shape: bf16[1024,128], index: 4, kind: input, shape index: {}]
  %s5 = inlined_call_operand.hbm [shape: bf16[1024,128], index: 5, kind: input, shape index: {}]
  %s6 = inlined_call_operand.vmem [shape: f32[1,128], index: 6, kind: input, shape index: {}]
  %s7 = inlined_call_operand.vmem [shape: s32[16,1], index: 7, kind: input, shape index: {}]
  %s8 = inlined_call_operand.vmem [shape: s32[16,1], index: 8, kind: output, shape index: {0}]
  %s9 = inlined_call_operand.vmem [shape: f32[16,1], index: 9, kind: output, shape index: {1}]
  %s10 = inlined_call_operand.vmem [shape: f32[16,1], index: 10, kind: output, shape index: {2}]
  %11 = xla_tuple %s8, %s9, %s10
  %s12 = sld [smem:[#allocation0]]
  $region86: #{tpu_custom_call.1} parent=0
    _
  %s14 = ssub.s32 1, %s12
  %s15 = scalar_select 0, %s14, %s12
  $region1: #{tpu_custom_call.1} parent=0
    #allocation7 [shape = 'u8[65536]{0}', space=vmem, size = 0x10000, scoped, tag = 'input window, operand 1, single buffered']
    #allocation8 [shape = 's32[1]{0}', space=sflag, size = 0x4, scoped, tag = 'scoped memory for tpu_custom_call.1']
    #allocation9 [shape = 'u8[65536]{0}', space=vmem, size = 0x10000, scoped, tag = 'input window, operand 2, single buffered']
    #allocation10 [shape = 's32[1]{0}', space=sflag, size = 0x4, scoped, tag = 'scoped memory for tpu_custom_call.1']
    #allocation11 [shape = 'u8[8192]{0}', space=vmem, size = 0x2000, scoped, tag = 'input window, operand 3, single buffered']
    #allocation12 [shape = 'u8[262144]{0}', space=vmem, size = 0x40000, scoped, tag = 'input window, operand 4, single buffered']
    #allocation13 [shape = 's32[1]{0}', space=sflag, size = 0x4, scoped, tag = 'scoped memory for tpu_custom_call.1']
    #allocation14 [shape = 'u8[262144]{0}', space=vmem, size = 0x40000, scoped, tag = 'input window, operand 5, single buffered']
    %16 = vsyncpa [#allocation8], 0
    %17 = vsyncpa [#allocation10], 0
    %18 = vsyncpa [#allocation13], 0
    // Predicated region
    $region2: #{tpu_custom_call.1} parent=1 // pred_check
      _
    $region3: #{tpu_custom_call.1} parent=1 // pred_check_branch
      %20 = sbr.rel (0) target = $region5
    $region4: #{tpu_custom_call.1} parent=1 // pred_region
      _
    $region5: #{tpu_custom_call.1} parent=1 // pred_fallthru
      _
    // Predicated region
    $region6: #{tpu_custom_call.1} parent=1 // pred_check
      _
    $region7: #{tpu_custom_call.1} parent=1 // pred_check_branch
      %22 = sbr.rel (0) target = $region9
    $region8: #{tpu_custom_call.1} parent=1 // pred_region
      %s24 = ssub.s32 2048, 2048
      %25 = vsyncadd [#allocation8], %s24
      %s26 = sshll.u32 [#allocation7], 4
      %s27 = int_to_ptr.vmem [resolvable:$true] %s26
      %32 = dma.hbm_to_vmem [thread:$0]  %s1, 2048, %s27, [#allocation8], 1024, 1024, 64
    $region9: #{tpu_custom_call.1} parent=1 // pred_fallthru
      _
    // Predicated region
    $region10: #{tpu_custom_call.1} parent=1 // pred_check
      _
    $region11: #{tpu_custom_call.1} parent=1 // pred_check_branch
      %34 = sbr.rel (0) target = $region13
    $region12: #{tpu_custom_call.1} parent=1 // pred_region
      %s36 = ssub.s32 2048, 2048
      %37 = vsyncadd [#allocation10], %s36
      %s38 = sshll.u32 [#allocation9], 4
      %s39 = int_to_ptr.vmem [resolvable:$true] %s38
      %44 = dma.hbm_to_vmem [thread:$0]  %s2, 2048, %s39, [#allocation10], 1024, 1024, 64
    $region13: #{tpu_custom_call.1} parent=1 // pred_fallthru
      _
    // Predicated region
    $region14: #{tpu_custom_call.1} parent=1 // pred_check
      _
    $region15: #{tpu_custom_call.1} parent=1 // pred_check_branch
      %46 = sbr.rel (0) target = $region17
    $region16: #{tpu_custom_call.1} parent=1 // pred_region
      %s48 = ssub.s32 256, 256
      %49 = vsyncadd [#allocation10], %s48
      %s50 = sshll.u32 [#allocation11], 4
      %s51 = int_to_ptr.vmem [resolvable:$true] %s50
      %56 = dma.hbm_to_vmem [thread:$0]  %s3, 256, %s51, [#allocation10], 64, 64, 4
    $region17: #{tpu_custom_call.1} parent=1 // pred_fallthru
      _
    // Predicated region
    $region18: #{tpu_custom_call.1} parent=1 // pred_check
      _
    $region19: #{tpu_custom_call.1} parent=1 // pred_check_branch
      %58 = sbr.rel (0) target = $region21
    $region20: #{tpu_custom_call.1} parent=1 // pred_region
      %s60 = ssub.s32 8192, 8192
      %61 = vsyncadd [#allocation13], %s60
      %s62 = sshll.u32 [#allocation12], 4
      %s63 = int_to_ptr.vmem [resolvable:$true] %s62
      %68 = dma.hbm_to_vmem [thread:$0]  %s4, 8192, %s63, [#allocation13], 64, 64, 4
    $region21: #{tpu_custom_call.1} parent=1 // pred_fallthru
      _
    // Predicated region
    $region22: #{tpu_custom_call.1} parent=1 // pred_check
      _
    $region23: #{tpu_custom_call.1} parent=1 // pred_check_branch
      %70 = sbr.rel (0) target = $region25
    $region24: #{tpu_custom_call.1} parent=1 // pred_region
      %s72 = ssub.s32 8192, 8192
      %73 = vsyncadd [#allocation13], %s72
      %s74 = sshll.u32 [#allocation14], 4
      %s75 = int_to_ptr.vmem [resolvable:$true] %s74
      %80 = dma.hbm_to_vmem [thread:$0]  %s5, 8192, %s75, [#allocation13], 64, 64, 4
    $region25: #{tpu_custom_call.1} parent=1 // pred_fallthru
      _
    // Predicated region
    $region26: #{tpu_custom_call.1} parent=1 // pred_check
      _
    $region27: #{tpu_custom_call.1} parent=1 // pred_check_branch
      %82 = sbr.rel (0) target = $region29
    $region28: #{tpu_custom_call.1} parent=1 // pred_region
      _
    $region29: #{tpu_custom_call.1} parent=1 // pred_fallthru
      _
    // Predicated region
    $region30: #{tpu_custom_call.1} parent=1 // pred_check
      _
    $region31: #{tpu_custom_call.1} parent=1 // pred_check_branch
      %84 = sbr.rel (0) target = $region33
    $region32: #{tpu_custom_call.1} parent=1 // pred_region
      _
    $region33: #{tpu_custom_call.1} parent=1 // pred_fallthru
      _
    // Predicated region
    $region34: #{tpu_custom_call.1} parent=1 // pred_check
      _
    $region35: #{tpu_custom_call.1} parent=1 // pred_check_branch
      %86 = sbr.rel (0) target = $region37
    $region36: #{tpu_custom_call.1} parent=1 // pred_region
      %87 = dma.done [#allocation8], 2048
    $region37: #{tpu_custom_call.1} parent=1 // pred_fallthru
      _
    // Predicated region
    $region38: #{tpu_custom_call.1} parent=1 // pred_check
      _
    $region39: #{tpu_custom_call.1} parent=1 // pred_check_branch
      %89 = sbr.rel (0) target = $region41
    $region40: #{tpu_custom_call.1} parent=1 // pred_region
      %90 = dma.done [#allocation10], 2048
    $region41: #{tpu_custom_call.1} parent=1 // pred_fallthru
      _
    // Predicated region
    $region42: #{tpu_custom_call.1} parent=1 // pred_check
      _
    $region43: #{tpu_custom_call.1} parent=1 // pred_check_branch
      %92 = sbr.rel (0) target = $region45
    $region44: #{tpu_custom_call.1} parent=1 // pred_region
      %93 = dma.done [#allocation10], 256
    $region45: #{tpu_custom_call.1} parent=1 // pred_fallthru
      _
    // Predicated region
    $region46: #{tpu_custom_call.1} parent=1 // pred_check
      _
    $region47: #{tpu_custom_call.1} parent=1 // pred_check_branch
      %95 = sbr.rel (0) target = $region49
    $region48: #{tpu_custom_call.1} parent=1 // pred_region
      %96 = dma.done [#allocation13], 8192
    $region49: #{tpu_custom_call.1} parent=1 // pred_fallthru
      _
    // Predicated region
    $region50: #{tpu_custom_call.1} parent=1 // pred_check
      _
    $region51: #{tpu_custom_call.1} parent=1 // pred_check_branch
      %98 = sbr.rel (0) target = $region53
    $region52: #{tpu_custom_call.1} parent=1 // pred_region
      %99 = dma.done [#allocation13], 8192
    $region53: #{tpu_custom_call.1} parent=1 // pred_fallthru
      _
    %p101 = scmp.eq.s32.totalorder 0, 0
    // Predicated region
    $region54: #{tpu_custom_call.1} parent=1 // pred_check
      %p102 = pneg %p101
    $region55: #{tpu_custom_call.1} parent=1 // pred_check_branch
      %104 = sbr.rel (%p102) target = $region57
    $region56: #{tpu_custom_call.1} parent=1 // pred_region
      %vm105 = vcmask 7168
      %106 = vst.msk [vmem:[#allocation2] sm:$0xff] %vm105, -inf
      %107 = vst.msk [vmem:[#allocation2 + $0x8] sm:$0xff] %vm105, -inf
      %108 = vst.msk [vmem:[#allocation3] sm:$0xff] %vm105, 0.0
      %109 = vst.msk [vmem:[#allocation3 + $0x8] sm:$0xff] %vm105, 0.0
      %110 = vst.msk [vmem:[#allocation4] sm:$0xff] %vm105, inf
      %111 = vst.msk [vmem:[#allocation4 + $0x8] sm:$0xff] %vm105, inf
      %112 = vst.msk [vmem:[#allocation5] sm:$0xff] %vm105, 0.0
      %113 = vst.msk [vmem:[#allocation5 + $0x8] sm:$0xff] %vm105, 0.0
      %114 = vst.msk [vmem:[#allocation6] sm:$0xff] %vm105, 0
      %115 = vst.msk [vmem:[#allocation6 + $0x8] sm:$0xff] %vm105, 0
    $region57: #{tpu_custom_call.1} parent=1 // pred_fallthru
      _
    %v116 = vld [vmem:[%s0] sm:$0xff]
    %v117 = vld [vmem:[%s0 + $0x8] sm:$0xff]
    %v118 = vpack.c.bf16 %v117, %v116
    %v119 = vld [vmem:[#allocation11] sm:$0xf]
    %v120 = vld [vmem:[#allocation11 + $0x4] sm:$0xf]
    %v121 = vld [vmem:[#allocation11 + $0x8] sm:$0xf]
    %v122 = vld [vmem:[#allocation11 + $0xc] sm:$0xf]
    %v123 = vld [vmem:[#allocation7] sm:$0xff]
    %v124 = vld [vmem:[#allocation7 + $0x8] sm:$0xff]
    %v125 = vld [vmem:[#allocation7 + $0x10] sm:$0xff]
    %v126 = vld [vmem:[#allocation7 + $0x18] sm:$0xff]
    %v127 = vld [vmem:[#allocation7 + $0x20] sm:$0xff]
    %v128 = vld [vmem:[#allocation7 + $0x28] sm:$0xff]
    %v129 = vld [vmem:[#allocation7 + $0x30] sm:$0xff]
    %v130 = vld [vmem:[#allocation7 + $0x38] sm:$0xff]
    %v131 = vld [vmem:[#allocation7 + $0x40] sm:$0xff]
    %v132 = vld [vmem:[#allocation7 + $0x48] sm:$0xff]
    %v133 = vld [vmem:[#allocation7 + $0x50] sm:$0xff]
    %v134 = vld [vmem:[#allocation7 + $0x58] sm:$0xff]
    %v135 = vld [vmem:[#allocation7 + $0x60] sm:$0xff]
    %v136 = vld [vmem:[#allocation7 + $0x68] sm:$0xff]
    %v137 = vld [vmem:[#allocation7 + $0x70] sm:$0xff]
    %v138 = vld [vmem:[#allocation7 + $0x78] sm:$0xff]
    %v139 = vpack.c.bf16 %v131, %v123
    %v140 = vpack.c.bf16 %v132, %v124
    %v141 = vpack.c.bf16 %v133, %v125
    %v142 = vpack.c.bf16 %v134, %v126
    %v143 = vpack.c.bf16 %v135, %v127
    %v144 = vpack.c.bf16 %v136, %v128
    %v145 = vpack.c.bf16 %v137, %v129
    %v146 = vpack.c.bf16 %v138, %v130
    %v147 = vld [vmem:[#allocation12] sm:$0xf]
    %v148 = vld [vmem:[#allocation12 + $0x4] sm:$0xf]
    %v149 = vld [vmem:[#allocation12 + $0x8] sm:$0xf]
    %v150 = vld [vmem:[#allocation12 + $0xc] sm:$0xf]
    %v151 = vld [vmem:[#allocation12 + $0x10] sm:$0xf]
    %v152 = vld [vmem:[#allocation12 + $0x14] sm:$0xf]
    %v153 = vld [vmem:[#allocation12 + $0x18] sm:$0xf]
    %v154 = vld [vmem:[#allocation12 + $0x1c] sm:$0xf]
    %v155 = vld [vmem:[#allocation12 + $0x20] sm:$0xf]
    %v156 = vld [vmem:[#allocation12 + $0x24] sm:$0xf]
    %v157 = vld [vmem:[#allocation12 + $0x28] sm:$0xf]
    %v158 = vld [vmem:[#allocation12 + $0x2c] sm:$0xf]
    %v159 = vld [vmem:[#allocation12 + $0x30] sm:$0xf]
    %v160 = vld [vmem:[#allocation12 + $0x34] sm:$0xf]
    %v161 = vld [vmem:[#allocation12 + $0x38] sm:$0xf]
    %v162 = vld [vmem:[#allocation12 + $0x3c] sm:$0xf]
    %v163 = vld [vmem:[#allocation12 + $0x40] sm:$0xf]
    %v164 = vld [vmem:[#allocation12 + $0x44] sm:$0xf]
    %v165 = vld [vmem:[#allocation12 + $0x48] sm:$0xf]
    %v166 = vld [vmem:[#allocation12 + $0x4c] sm:$0xf]
    %v167 = vld [vmem:[#allocation12 + $0x50] sm:$0xf]
    %v168 = vld [vmem:[#allocation12 + $0x54] sm:$0xf]
    %v169 = vld [vmem:[#allocation12 + $0x58] sm:$0xf]
    %v170 = vld [vmem:[#allocation12 + $0x5c] sm:$0xf]
    %v171 = vld [vmem:[#allocation12 + $0x60] sm:$0xf]
    %v172 = vld [vmem:[#allocation12 + $0x64] sm:$0xf]
    %v173 = vld [vmem:[#allocation12 + $0x68] sm:$0xf]
    %v174 = vld [vmem:[#allocation12 + $0x6c] sm:$0xf]
    %v175 = vld [vmem:[#allocation12 + $0x70] sm:$0xf]
    %v176 = vld [vmem:[#allocation12 + $0x74] sm:$0xf]
    %v177 = vld [vmem:[#allocation12 + $0x78] sm:$0xf]
    %v178 = vld [vmem:[#allocation12 + $0x7c] sm:$0xf]
    %v179 = vld [vmem:[#allocation12 + $0x80] sm:$0xf]
    %v180 = vld [vmem:[#allocation12 + $0x84] sm:$0xf]
    %v181 = vld [vmem:[#allocation12 + $0x88] sm:$0xf]
    %v182 = vld [vmem:[#allocation12 + $0x8c] sm:$0xf]
    %v183 = vld [vmem:[#allocation12 + $0x90] sm:$0xf]
    %v184 = vld [vmem:[#allocation12 + $0x94] sm:$0xf]
    %v185 = vld [vmem:[#allocation12 + $0x98] sm:$0xf]
    %v186 = vld [vmem:[#allocation12 + $0x9c] sm:$0xf]
    %v187 = vld [vmem:[#allocation12 + $0xa0] sm:$0xf]
    %v188 = vld [vmem:[#allocation12 + $0xa4] sm:$0xf]
    %v189 = vld [vmem:[#allocation12 + $0xa8] sm:$0xf]
    %v190 = vld [vmem:[#allocation12 + $0xac] sm:$0xf]
    %v191 = vld [vmem:[#allocation12 + $0xb0] sm:$0xf]
    %v192 = vld [vmem:[#allocation12 + $0xb4] sm:$0xf]
    %v193 = vld [vmem:[#allocation12 + $0xb8] sm:$0xf]
    %v194 = vld [vmem:[#allocation12 + $0xbc] sm:$0xf]
    %v195 = vld [vmem:[#allocation12 + $0xc0] sm:$0xf]
    %v196 = vld [vmem:[#allocation12 + $0xc4] sm:$0xf]
    %v197 = vld [vmem:[#allocation12 + $0xc8] sm:$0xf]
    %v198 = vld [vmem:[#allocation12 + $0xcc] sm:$0xf]
    %v199 = vld [vmem:[#allocation12 + $0xd0] sm:$0xf]
    %v200 = vld [vmem:[#allocation12 + $0xd4] sm:$0xf]
    %v201 = vld [vmem:[#allocation12 + $0xd8] sm:$0xf]
    %v202 = vld [vmem:[#allocation12 + $0xdc] sm:$0xf]
    %v203 = vld [vmem:[#allocation12 + $0xe0] sm:$0xf]
    %v204 = vld [vmem:[#allocation12 + $0xe4] sm:$0xf]
    %v205 = vld [vmem:[#allocation12 + $0xe8] sm:$0xf]
    %v206 = vld [vmem:[#allocation12 + $0xec] sm:$0xf]
    %v207 = vld [vmem:[#allocation12 + $0xf0] sm:$0xf]
    %v208 = vld [vmem:[#allocation12 + $0xf4] sm:$0xf]
    %v209 = vld [vmem:[#allocation12 + $0xf8] sm:$0xf]
    %v210 = vld [vmem:[#allocation12 + $0xfc] sm:$0xf]
    %v211 = vld [vmem:[#allocation12 + $0x100] sm:$0xf]
    %v212 = vld [vmem:[#allocation12 + $0x104] sm:$0xf]
    %v213 = vld [vmem:[#allocation12 + $0x108] sm:$0xf]
    %v214 = vld [vmem:[#allocation12 + $0x10c] sm:$0xf]
    %v215 = vld [vmem:[#allocation12 + $0x110] sm:$0xf]
    %v216 = vld [vmem:[#allocation12 + $0x114] sm:$0xf]
    %v217 = vld [vmem:[#allocation12 + $0x118] sm:$0xf]
    %v218 = vld [vmem:[#allocation12 + $0x11c] sm:$0xf]
    %v219 = vld [vmem:[#allocation12 + $0x120] sm:$0xf]
    %v220 = vld [vmem:[#allocation12 + $0x124] sm:$0xf]
    %v221 = vld [vmem:[#allocation12 + $0x128] sm:$0xf]
    %v222 = vld [vmem:[#allocation12 + $0x12c] sm:$0xf]
    %v223 = vld [vmem:[#allocation12 + $0x130] sm:$0xf]
    %v224 = vld [vmem:[#allocation12 + $0x134] sm:$0xf]
    %v225 = vld [vmem:[#allocation12 + $0x138] sm:$0xf]
    %v226 = vld [vmem:[#allocation12 + $0x13c] sm:$0xf]
    %v227 = vld [vmem:[#allocation12 + $0x140] sm:$0xf]
    %v228 = vld [vmem:[#allocation12 + $0x144] sm:$0xf]
    %v229 = vld [vmem:[#allocation12 + $0x148] sm:$0xf]
    %v230 = vld [vmem:[#allocation12 + $0x14c] sm:$0xf]
    %v231 = vld [vmem:[#allocation12 + $0x150] sm:$0xf]
    %v232 = vld [vmem:[#allocation12 + $0x154] sm:$0xf]
    %v233 = vld [vmem:[#allocation12 + $0x158] sm:$0xf]
    %v234 = vld [vmem:[#allocation12 + $0x15c] sm:$0xf]
    %v235 = vld [vmem:[#allocation12 + $0x160] sm:$0xf]
    %v236 = vld [vmem:[#allocation12 + $0x164] sm:$0xf]
    %v237 = vld [vmem:[#allocation12 + $0x168] sm:$0xf]
    %v238 = vld [vmem:[#allocation12 + $0x16c] sm:$0xf]
    %v239 = vld [vmem:[#allocation12 + $0x170] sm:$0xf]
    %v240 = vld [vmem:[#allocation12 + $0x174] sm:$0xf]
    %v241 = vld [vmem:[#allocation12 + $0x178] sm:$0xf]
    %v242 = vld [vmem:[#allocation12 + $0x17c] sm:$0xf]
    %v243 = vld [vmem:[#allocation12 + $0x180] sm:$0xf]
    %v244 = vld [vmem:[#allocation12 + $0x184] sm:$0xf]
    %v245 = vld [vmem:[#allocation12 + $0x188] sm:$0xf]
    %v246 = vld [vmem:[#allocation12 + $0x18c] sm:$0xf]
    %v247 = vld [vmem:[#allocation12 + $0x190] sm:$0xf]
    %v248 = vld [vmem:[#allocation12 + $0x194] sm:$0xf]
    %v249 = vld [vmem:[#allocation12 + $0x198] sm:$0xf]
    %v250 = vld [vmem:[#allocation12 + $0x19c] sm:$0xf]
    %v251 = vld [vmem:[#allocation12 + $0x1a0] sm:$0xf]
    %v252 = vld [vmem:[#allocation12 + $0x1a4] sm:$0xf]
    %v253 = vld [vmem:[#allocation12 + $0x1a8] sm:$0xf]
    %v254 = vld [vmem:[#allocation12 + $0x1ac] sm:$0xf]
    %v255 = vld [vmem:[#allocation12 + $0x1b0] sm:$0xf]
    %v256 = vld [vmem:[#allocation12 + $0x1b4] sm:$0xf]
    %v257 = vld [vmem:[#allocation12 + $0x1b8] sm:$0xf]
    %v258 = vld [vmem:[#allocation12 + $0x1bc] sm:$0xf]
    %v259 = vld [vmem:[#allocation12 + $0x1c0] sm:$0xf]
    %v260 = vld [vmem:[#allocation12 + $0x1c4] sm:$0xf]
    %v261 = vld [vmem:[#allocation12 + $0x1c8] sm:$0xf]
    %v262 = vld [vmem:[#allocation12 + $0x1cc] sm:$0xf]
    %v263 = vld [vmem:[#allocation12 + $0x1d0] sm:$0xf]
    %v264 = vld [vmem:[#allocation12 + $0x1d4] sm:$0xf]
    %v265 = vld [vmem:[#allocation12 + $0x1d8] sm:$0xf]
    %v266 = vld [vmem:[#allocation12 + $0x1dc] sm:$0xf]
    %v267 = vld [vmem:[#allocation12 + $0x1e0] sm:$0xf]
    %v268 = vld [vmem:[#allocation12 + $0x1e4] sm:$0xf]
    %v269 = vld [vmem:[#allocation12 + $0x1e8] sm:$0xf]
    %v270 = vld [vmem:[#allocation12 + $0x1ec] sm:$0xf]
    %v271 = vld [vmem:[#allocation12 + $0x1f0] sm:$0xf]
    %v272 = vld [vmem:[#allocation12 + $0x1f4] sm:$0xf]
    %v273 = vld [vmem:[#allocation12 + $0x1f8] sm:$0xf]
    %v274 = vld [vmem:[#allocation12 + $0x1fc] sm:$0xf]
    %v403 = vunpack.c.l.b16 %v147
    %v404 = vunpack.c.l.b16 %v148
    %v405 = vunpack.c.l.b16 %v149
    %v406 = vunpack.c.l.b16 %v150
    %v407 = vunpack.c.l.b16 %v151
    %v408 = vunpack.c.l.b16 %v152
    %v409 = vunpack.c.l.b16 %v153
    %v410 = vunpack.c.l.b16 %v154
    %v411 = vunpack.c.l.b16 %v155
    %v412 = vunpack.c.l.b16 %v156
    %v413 = vunpack.c.l.b16 %v157
    %v414 = vunpack.c.l.b16 %v158
    %v415 = vunpack.c.l.b16 %v159
    %v416 = vunpack.c.l.b16 %v160
    %v417 = vunpack.c.l.b16 %v161
    %v418 = vunpack.c.l.b16 %v162
    %v419 = vunpack.c.l.b16 %v163
    %v420 = vunpack.c.l.b16 %v164
    %v421 = vunpack.c.l.b16 %v165
    %v422 = vunpack.c.l.b16 %v166
    %v423 = vunpack.c.l.b16 %v167
    %v424 = vunpack.c.l.b16 %v168
    %v425 = vunpack.c.l.b16 %v169
    %v426 = vunpack.c.l.b16 %v170
    %v427 = vunpack.c.l.b16 %v171
    %v428 = vunpack.c.l.b16 %v172
    %v429 = vunpack.c.l.b16 %v173
    %v430 = vunpack.c.l.b16 %v174
    %v431 = vunpack.c.l.b16 %v175
    %v432 = vunpack.c.l.b16 %v176
    %v433 = vunpack.c.l.b16 %v177
    %v434 = vunpack.c.l.b16 %v178
    %v435 = vunpack.c.l.b16 %v179
    %v436 = vunpack.c.l.b16 %v180
    %v437 = vunpack.c.l.b16 %v181
    %v438 = vunpack.c.l.b16 %v182
    %v439 = vunpack.c.l.b16 %v183
    %v440 = vunpack.c.l.b16 %v184
    %v441 = vunpack.c.l.b16 %v185
    %v442 = vunpack.c.l.b16 %v186
    %v443 = vunpack.c.l.b16 %v187
    %v444 = vunpack.c.l.b16 %v188
    %v445 = vunpack.c.l.b16 %v189
    %v446 = vunpack.c.l.b16 %v190
    %v447 = vunpack.c.l.b16 %v191
    %v448 = vunpack.c.l.b16 %v192
    %v449 = vunpack.c.l.b16 %v193
    %v450 = vunpack.c.l.b16 %v194
    %v451 = vunpack.c.l.b16 %v195
    %v452 = vunpack.c.l.b16 %v196
    %v453 = vunpack.c.l.b16 %v197
    %v454 = vunpack.c.l.b16 %v198
    %v455 = vunpack.c.l.b16 %v199
    %v456 = vunpack.c.l.b16 %v200
    %v457 = vunpack.c.l.b16 %v201
    %v458 = vunpack.c.l.b16 %v202
    %v459 = vunpack.c.l.b16 %v203
    %v460 = vunpack.c.l.b16 %v204
    %v461 = vunpack.c.l.b16 %v205
    %v462 = vunpack.c.l.b16 %v206
    %v463 = vunpack.c.l.b16 %v207
    %v464 = vunpack.c.l.b16 %v208
    %v465 = vunpack.c.l.b16 %v209
    %v466 = vunpack.c.l.b16 %v210
    %v467 = vunpack.c.l.b16 %v211
    %v468 = vunpack.c.l.b16 %v212
    %v469 = vunpack.c.l.b16 %v213
    %v470 = vunpack.c.l.b16 %v214
    %v471 = vunpack.c.l.b16 %v215
    %v472 = vunpack.c.l.b16 %v216
    %v473 = vunpack.c.l.b16 %v217
    %v474 = vunpack.c.l.b16 %v218
    %v475 = vunpack.c.l.b16 %v219
    %v476 = vunpack.c.l.b16 %v220
    %v477 = vunpack.c.l.b16 %v221
    %v478 = vunpack.c.l.b16 %v222
    %v479 = vunpack.c.l.b16 %v223
    %v480 = vunpack.c.l.b16 %v224
    %v481 = vunpack.c.l.b16 %v225
    %v482 = vunpack.c.l.b16 %v226
    %v483 = vunpack.c.l.b16 %v227
    %v484 = vunpack.c.l.b16 %v228
    %v485 = vunpack.c.l.b16 %v229
    %v486 = vunpack.c.l.b16 %v230
    %v487 = vunpack.c.l.b16 %v231
    %v488 = vunpack.c.l.b16 %v232
    %v489 = vunpack.c.l.b16 %v233
    %v490 = vunpack.c.l.b16 %v234
    %v491 = vunpack.c.l.b16 %v235
    %v492 = vunpack.c.l.b16 %v236
    %v493 = vunpack.c.l.b16 %v237
    %v494 = vunpack.c.l.b16 %v238
    %v495 = vunpack.c.l.b16 %v239
    %v496 = vunpack.c.l.b16 %v240
    %v497 = vunpack.c.l.b16 %v241
    %v498 = vunpack.c.l.b16 %v242
    %v499 = vunpack.c.l.b16 %v243
    %v500 = vunpack.c.l.b16 %v244
    %v501 = vunpack.c.l.b16 %v245
    %v502 = vunpack.c.l.b16 %v246
    %v503 = vunpack.c.l.b16 %v247
    %v504 = vunpack.c.l.b16 %v248
    %v505 = vunpack.c.l.b16 %v249
    %v506 = vunpack.c.l.b16 %v250
    %v507 = vunpack.c.l.b16 %v251
    %v508 = vunpack.c.l.b16 %v252
    %v509 = vunpack.c.l.b16 %v253
    %v510 = vunpack.c.l.b16 %v254
    %v511 = vunpack.c.l.b16 %v255
    %v512 = vunpack.c.l.b16 %v256
    %v513 = vunpack.c.l.b16 %v257
    %v514 = vunpack.c.l.b16 %v258
    %v515 = vunpack.c.l.b16 %v259
    %v516 = vunpack.c.l.b16 %v260
    %v517 = vunpack.c.l.b16 %v261
    %v518 = vunpack.c.l.b16 %v262
    %v519 = vunpack.c.l.b16 %v263
    %v520 = vunpack.c.l.b16 %v264
    %v521 = vunpack.c.l.b16 %v265
    %v522 = vunpack.c.l.b16 %v266
    %v523 = vunpack.c.l.b16 %v267
    %v524 = vunpack.c.l.b16 %v268
    %v525 = vunpack.c.l.b16 %v269
    %v526 = vunpack.c.l.b16 %v270
    %v527 = vunpack.c.l.b16 %v271
    %v528 = vunpack.c.l.b16 %v272
    %v529 = vunpack.c.l.b16 %v273
    %v530 = vunpack.c.l.b16 %v274
    %v531 = vpack.c.b16 %v404, %v403
    %v532 = vpack.c.b16 %v406, %v405
    %v533 = vpack.c.b16 %v408, %v407
    %v534 = vpack.c.b16 %v410, %v409
    %v535 = vpack.c.b16 %v412, %v411
    %v536 = vpack.c.b16 %v414, %v413
    %v537 = vpack.c.b16 %v416, %v415
    %v538 = vpack.c.b16 %v418, %v417
    %v539 = vpack.c.b16 %v420, %v419
    %v540 = vpack.c.b16 %v422, %v421
    %v541 = vpack.c.b16 %v424, %v423
    %v542 = vpack.c.b16 %v426, %v425
    %v543 = vpack.c.b16 %v428, %v427
    %v544 = vpack.c.b16 %v430, %v429
    %v545 = vpack.c.b16 %v432, %v431
    %v546 = vpack.c.b16 %v434, %v433
    %v547 = vpack.c.b16 %v436, %v435
    %v548 = vpack.c.b16 %v438, %v437
    %v549 = vpack.c.b16 %v440, %v439
    %v550 = vpack.c.b16 %v442, %v441
    %v551 = vpack.c.b16 %v444, %v443
    %v552 = vpack.c.b16 %v446, %v445
    %v553 = vpack.c.b16 %v448, %v447
    %v554 = vpack.c.b16 %v450, %v449
    %v555 = vpack.c.b16 %v452, %v451
    %v556 = vpack.c.b16 %v454, %v453
    %v557 = vpack.c.b16 %v456, %v455
    %v558 = vpack.c.b16 %v458, %v457
    %v559 = vpack.c.b16 %v460, %v459
    %v560 = vpack.c.b16 %v462, %v461
    %v561 = vpack.c.b16 %v464, %v463
    %v562 = vpack.c.b16 %v466, %v465
    %v563 = vpack.c.b16 %v468, %v467
    %v564 = vpack.c.b16 %v470, %v469
    %v565 = vpack.c.b16 %v472, %v471
    %v566 = vpack.c.b16 %v474, %v473
    %v567 = vpack.c.b16 %v476, %v475
    %v568 = vpack.c.b16 %v478, %v477
    %v569 = vpack.c.b16 %v480, %v479
    %v570 = vpack.c.b16 %v482, %v481
    %v571 = vpack.c.b16 %v484, %v483
    %v572 = vpack.c.b16 %v486, %v485
    %v573 = vpack.c.b16 %v488, %v487
    %v574 = vpack.c.b16 %v490, %v489
    %v575 = vpack.c.b16 %v492, %v491
    %v576 = vpack.c.b16 %v494, %v493
    %v577 = vpack.c.b16 %v496, %v495
    %v578 = vpack.c.b16 %v498, %v497
    %v579 = vpack.c.b16 %v500, %v499
    %v580 = vpack.c.b16 %v502, %v501
    %v581 = vpack.c.b16 %v504, %v503
    %v582 = vpack.c.b16 %v506, %v505
    %v583 = vpack.c.b16 %v508, %v507
    %v584 = vpack.c.b16 %v510, %v509
    %v585 = vpack.c.b16 %v512, %v511
    %v586 = vpack.c.b16 %v514, %v513
    %v587 = vpack.c.b16 %v516, %v515
    %v588 = vpack.c.b16 %v518, %v517
    %v589 = vpack.c.b16 %v520, %v519
    %v590 = vpack.c.b16 %v522, %v521
    %v591 = vpack.c.b16 %v524, %v523
    %v592 = vpack.c.b16 %v526, %v525
    %v593 = vpack.c.b16 %v528, %v527
    %v594 = vpack.c.b16 %v530, %v529
    %659 = vmatprep.subr.bf16.mxu0 0
    %660 = vmatpush1.bf16.msra.mxu0 %v538
    %661 = vmatprep.subr.bf16.mxu0 0
    %662 = vmatpush1.bf16.msra.mxu0 %v537
    %663 = vmatprep.subr.bf16.mxu0 0
    %664 = vmatpush1.bf16.msra.mxu0 %v536
    %665 = vmatprep.subr.bf16.mxu0 0
    %666 = vmatpush1.bf16.msra.mxu0 %v535
    %667 = vmatprep.subr.bf16.mxu0 0
    %668 = vmatpush1.bf16.msra.mxu0 %v534
    %669 = vmatprep.subr.bf16.mxu0 0
    %670 = vmatpush1.bf16.msra.mxu0 %v533
    %671 = vmatprep.subr.bf16.mxu0 0
    %672 = vmatpush1.bf16.msra.mxu0 %v532
    %673 = vmatprep.subr.bf16.mxu0 0
    %674 = vmatpush1.bf16.msra.mxu0 %v531
    %675 = vmatprep.subr.bf16.mxu0 0
    %676 = vmatpush2.bf16.msra.mxu0 %v546
    %677 = vmatprep.subr.bf16.mxu0 0
    %678 = vmatpush2.bf16.msra.mxu0 %v545
    %679 = vmatprep.subr.bf16.mxu0 0
    %680 = vmatpush2.bf16.msra.mxu0 %v544
    %681 = vmatprep.subr.bf16.mxu0 0
    %682 = vmatpush2.bf16.msra.mxu0 %v543
    %683 = vmatprep.subr.bf16.mxu0 0
    %684 = vmatpush2.bf16.msra.mxu0 %v542
    %685 = vmatprep.subr.bf16.mxu0 0
    %686 = vmatpush2.bf16.msra.mxu0 %v541
    %687 = vmatprep.subr.bf16.mxu0 0
    %688 = vmatpush2.bf16.msra.mxu0 %v540
    %689 = vmatprep.subr.bf16.mxu0 0
    %690 = vmatpush2.bf16.msra.mxu0 %v539
    %691 = vmatprep.mubr.bf16.mxu0 %v140
    %692 = vmatmul.mubr.bf16.gmra.mxu0 %v139
    %v693 = vpop.f32.mrf.mxu0
    %v694 = vadd.f32 0.0, %v693
    %v695 = vpop.f32.mrf.mxu0
    %v696 = vpop.f32.mrf.mxu0
    %v697 = vadd.f32 0.0, %v696
    %v698 = vpop.f32.mrf.mxu0
    %699 = vdwg.mxu0
    %700 = vmatprep.subr.bf16.mxu0 0
    %701 = vmatpush1.bf16.msra.mxu0 %v554
    %702 = vmatprep.subr.bf16.mxu0 0
    %703 = vmatpush1.bf16.msra.mxu0 %v553
    %704 = vmatprep.subr.bf16.mxu0 0
    %705 = vmatpush1.bf16.msra.mxu0 %v552
    %706 = vmatprep.subr.bf16.mxu0 0
    %707 = vmatpush1.bf16.msra.mxu0 %v551
    %708 = vmatprep.subr.bf16.mxu0 0
    %709 = vmatpush1.bf16.msra.mxu0 %v550
    %710 = vmatprep.subr.bf16.mxu0 0
    %711 = vmatpush1.bf16.msra.mxu0 %v549
    %712 = vmatprep.subr.bf16.mxu0 0
    %713 = vmatpush1.bf16.msra.mxu0 %v548
    %714 = vmatprep.subr.bf16.mxu0 0
    %715 = vmatpush1.bf16.msra.mxu0 %v547
    %716 = vmatprep.subr.bf16.mxu0 0
    %717 = vmatpush2.bf16.msra.mxu0 %v562
    %718 = vmatprep.subr.bf16.mxu0 0
    %719 = vmatpush2.bf16.msra.mxu0 %v561
    %720 = vmatprep.subr.bf16.mxu0 0
    %721 = vmatpush2.bf16.msra.mxu0 %v560
    %722 = vmatprep.subr.bf16.mxu0 0
    %723 = vmatpush2.bf16.msra.mxu0 %v559
    %724 = vmatprep.subr.bf16.mxu0 0
    %725 = vmatpush2.bf16.msra.mxu0 %v558
    %726 = vmatprep.subr.bf16.mxu0 0
    %727 = vmatpush2.bf16.msra.mxu0 %v557
    %728 = vmatprep.subr.bf16.mxu0 0
    %729 = vmatpush2.bf16.msra.mxu0 %v556
    %730 = vmatprep.subr.bf16.mxu0 0
    %731 = vmatpush2.bf16.msra.mxu0 %v555
    %732 = vmatprep.mubr.bf16.mxu0 %v142
    %733 = vmatmul.mubr.bf16.gmra.mxu0 %v141
    %v734 = vpop.f32.mrf.mxu0
    %v735 = vadd.f32 %v694, %v734
    %v736 = vpop.f32.mrf.mxu0
    %v737 = vpop.f32.mrf.mxu0
    %v738 = vadd.f32 %v697, %v737
    %v739 = vpop.f32.mrf.mxu0
    %740 = vdwg.mxu0
    %741 = vmatprep.subr.bf16.mxu0 0
    %742 = vmatpush1.bf16.msra.mxu0 %v570
    %743 = vmatprep.subr.bf16.mxu0 0
    %744 = vmatpush1.bf16.msra.mxu0 %v569
    %745 = vmatprep.subr.bf16.mxu0 0
    %746 = vmatpush1.bf16.msra.mxu0 %v568
    %747 = vmatprep.subr.bf16.mxu0 0
    %748 = vmatpush1.bf16.msra.mxu0 %v567
    %749 = vmatprep.subr.bf16.mxu0 0
    %750 = vmatpush1.bf16.msra.mxu0 %v566
    %751 = vmatprep.subr.bf16.mxu0 0
    %752 = vmatpush1.bf16.msra.mxu0 %v565
    %753 = vmatprep.subr.bf16.mxu0 0
    %754 = vmatpush1.bf16.msra.mxu0 %v564
    %755 = vmatprep.subr.bf16.mxu0 0
    %756 = vmatpush1.bf16.msra.mxu0 %v563
    %757 = vmatprep.subr.bf16.mxu0 0
    %758 = vmatpush2.bf16.msra.mxu0 %v578
    %759 = vmatprep.subr.bf16.mxu0 0
    %760 = vmatpush2.bf16.msra.mxu0 %v577
    %761 = vmatprep.subr.bf16.mxu0 0
    %762 = vmatpush2.bf16.msra.mxu0 %v576
    %763 = vmatprep.subr.bf16.mxu0 0
    %764 = vmatpush2.bf16.msra.mxu0 %v575
    %765 = vmatprep.subr.bf16.mxu0 0
    %766 = vmatpush2.bf16.msra.mxu0 %v574
    %767 = vmatprep.subr.bf16.mxu0 0
    %768 = vmatpush2.bf16.msra.mxu0 %v573
    %769 = vmatprep.subr.bf16.mxu0 0
    %770 = vmatpush2.bf16.msra.mxu0 %v572
    %771 = vmatprep.subr.bf16.mxu0 0
    %772 = vmatpush2.bf16.msra.mxu0 %v571
    %773 = vmatprep.mubr.bf16.mxu0 %v144
    %774 = vmatmul.mubr.bf16.gmra.mxu0 %v143
    %v775 = vpop.f32.mrf.mxu0
    %v776 = vadd.f32 %v735, %v775
    %v777 = vpop.f32.mrf.mxu0
    %v778 = vpop.f32.mrf.mxu0
    %v779 = vadd.f32 %v738, %v778
    %v780 = vpop.f32.mrf.mxu0
    %781 = vdwg.mxu0
    %782 = vmatprep.subr.bf16.mxu0 0
    %783 = vmatpush1.bf16.msra.mxu0 %v586
    %784 = vmatprep.subr.bf16.mxu0 0
    %785 = vmatpush1.bf16.msra.mxu0 %v585
    %786 = vmatprep.subr.bf16.mxu0 0
    %787 = vmatpush1.bf16.msra.mxu0 %v584
    %788 = vmatprep.subr.bf16.mxu0 0
    %789 = vmatpush1.bf16.msra.mxu0 %v583
    %790 = vmatprep.subr.bf16.mxu0 0
    %791 = vmatpush1.bf16.msra.mxu0 %v582
    %792 = vmatprep.subr.bf16.mxu0 0
    %793 = vmatpush1.bf16.msra.mxu0 %v581
    %794 = vmatprep.subr.bf16.mxu0 0
    %795 = vmatpush1.bf16.msra.mxu0 %v580
    %796 = vmatprep.subr.bf16.mxu0 0
    %797 = vmatpush1.bf16.msra.mxu0 %v579
    %798 = vmatprep.subr.bf16.mxu0 0
    %799 = vmatpush2.bf16.msra.mxu0 %v594
    %800 = vmatprep.subr.bf16.mxu0 0
    %801 = vmatpush2.bf16.msra.mxu0 %v593
    %802 = vmatprep.subr.bf16.mxu0 0
    %803 = vmatpush2.bf16.msra.mxu0 %v592
    %804 = vmatprep.subr.bf16.mxu0 0
    %805 = vmatpush2.bf16.msra.mxu0 %v591
    %806 = vmatprep.subr.bf16.mxu0 0
    %807 = vmatpush2.bf16.msra.mxu0 %v590
    %808 = vmatprep.subr.bf16.mxu0 0
    %809 = vmatpush2.bf16.msra.mxu0 %v589
    %810 = vmatprep.subr.bf16.mxu0 0
    %811 = vmatpush2.bf16.msra.mxu0 %v588
    %812 = vmatprep.subr.bf16.mxu0 0
    %813 = vmatpush2.bf16.msra.mxu0 %v587
    %814 = vmatprep.mubr.bf16.mxu0 %v146
    %815 = vmatmul.mubr.bf16.gmra.mxu0 %v145
    %v816 = vpop.f32.mrf.mxu0
    %v817 = vadd.f32 %v776, %v816
    %v818 = vpop.f32.mrf.mxu0
    %v819 = vpop.f32.mrf.mxu0
    %v820 = vadd.f32 %v779, %v819
    %v821 = vpop.f32.mrf.mxu0
    %822 = vdwg.mxu0
    %v827 = vunpack.c.l.b16 %v119
    %v828 = vunpack.c.l.b16 %v120
    %v829 = vunpack.c.l.b16 %v121
    %v830 = vunpack.c.l.b16 %v122
    %v831 = vpack.c.b16 %v828, %v827
    %v832 = vpack.c.b16 %v830, %v829
    %vm835 = vcmask 261120
    %v837 = vsel %vm835, %v118, 0
    %839 = vmatprep.subr.bf16.mxu0 0
    %840 = vmatpush1.bf16.msra.mxu0 0
    %841 = vmatprep.subr.bf16.mxu0 0
    %842 = vmatpush1.bf16.msra.mxu0 0
    %843 = vmatprep.subr.bf16.mxu0 0
    %844 = vmatpush1.bf16.msra.mxu0 0
    %845 = vmatprep.subr.bf16.mxu0 0
    %846 = vmatpush1.bf16.msra.mxu0 0
    %847 = vmatprep.subr.bf16.mxu0 0
    %848 = vmatpush1.bf16.msra.mxu0 0
    %849 = vmatprep.subr.bf16.mxu0 0
    %850 = vmatpush1.bf16.msra.mxu0 0
    %851 = vmatprep.subr.bf16.mxu0 0
    %852 = vmatpush1.bf16.msra.mxu0 %v832
    %853 = vmatprep.subr.bf16.mxu0 0
    %854 = vmatpush1.bf16.msra.mxu0 %v831
    %855 = vmatprep.subr.bf16.mxu0 0
    %856 = vmatpush2.bf16.msra.mxu0 0
    %857 = vmatprep.subr.bf16.mxu0 0
    %858 = vmatpush2.bf16.msra.mxu0 0
    %859 = vmatprep.subr.bf16.mxu0 0
    %860 = vmatpush2.bf16.msra.mxu0 0
    %861 = vmatprep.subr.bf16.mxu0 0
    %862 = vmatpush2.bf16.msra.mxu0 0
    %863 = vmatprep.subr.bf16.mxu0 0
    %864 = vmatpush2.bf16.msra.mxu0 0
    %865 = vmatprep.subr.bf16.mxu0 0
    %866 = vmatpush2.bf16.msra.mxu0 0
    %867 = vmatprep.subr.bf16.mxu0 0
    %868 = vmatpush2.bf16.msra.mxu0 0
    %869 = vmatprep.subr.bf16.mxu0 0
    %870 = vmatpush2.bf16.msra.mxu0 0
    %871 = vmatprep.mubr.bf16.mxu0 0
    %872 = vmatmul.mubr.bf16.gmra.mxu0 %v837
    %v873 = vpop.f32.mrf.mxu0
    %v874 = vadd.f32 %v817, %v873
    %v875 = vpop.f32.mrf.mxu0
    %v876 = vpop.f32.mrf.mxu0
    %v877 = vadd.f32 %v820, %v876
    %v878 = vpop.f32.mrf.mxu0
    %879 = vdwg.mxu0
    %v880 = vld [vmem:[#allocation9] sm:$0xff]
    %v881 = vld [vmem:[#allocation9 + $0x8] sm:$0xff]
    %v882 = vld [vmem:[#allocation9 + $0x10] sm:$0xff]
    %v883 = vld [vmem:[#allocation9 + $0x18] sm:$0xff]
    %v884 = vld [vmem:[#allocation9 + $0x20] sm:$0xff]
    %v885 = vld [vmem:[#allocation9 + $0x28] sm:$0xff]
    %v886 = vld [vmem:[#allocation9 + $0x30] sm:$0xff]
    %v887 = vld [vmem:[#allocation9 + $0x38] sm:$0xff]
    %v888 = vld [vmem:[#allocation9 + $0x40] sm:$0xff]
    %v889 = vld [vmem:[#allocation9 + $0x48] sm:$0xff]
    %v890 = vld [vmem:[#allocation9 + $0x50] sm:$0xff]
    %v891 = vld [vmem:[#allocation9 + $0x58] sm:$0xff]
    %v892 = vld [vmem:[#allocation9 + $0x60] sm:$0xff]
    %v893 = vld [vmem:[#allocation9 + $0x68] sm:$0xff]
    %v894 = vld [vmem:[#allocation9 + $0x70] sm:$0xff]
    %v895 = vld [vmem:[#allocation9 + $0x78] sm:$0xff]
    %v896 = vpack.c.bf16 %v888, %v880
    %v897 = vpack.c.bf16 %v889, %v881
    %v898 = vpack.c.bf16 %v890, %v882
    %v899 = vpack.c.bf16 %v891, %v883
    %v900 = vpack.c.bf16 %v892, %v884
    %v901 = vpack.c.bf16 %v893, %v885
    %v902 = vpack.c.bf16 %v894, %v886
    %v903 = vpack.c.bf16 %v895, %v887
    %v904 = vld [vmem:[#allocation14] sm:$0xf]
    %v905 = vld [vmem:[#allocation14 + $0x4] sm:$0xf]
    %v906 = vld [vmem:[#allocation14 + $0x8] sm:$0xf]
    %v907 = vld [vmem:[#allocation14 + $0xc] sm:$0xf]
    %v908 = vld [vmem:[#allocation14 + $0x10] sm:$0xf]
    %v909 = vld [vmem:[#allocation14 + $0x14] sm:$0xf]
    %v910 = vld [vmem:[#allocation14 + $0x18] sm:$0xf]
    %v911 = vld [vmem:[#allocation14 + $0x1c] sm:$0xf]
    %v912 = vld [vmem:[#allocation14 + $0x20] sm:$0xf]
    %v913 = vld [vmem:[#allocation14 + $0x24] sm:$0xf]
    %v914 = vld [vmem:[#allocation14 + $0x28] sm:$0xf]
    %v915 = vld [vmem:[#allocation14 + $0x2c] sm:$0xf]
    %v916 = vld [vmem:[#allocation14 + $0x30] sm:$0xf]
    %v917 = vld [vmem:[#allocation14 + $0x34] sm:$0xf]
    %v918 = vld [vmem:[#allocation14 + $0x38] sm:$0xf]
    %v919 = vld [vmem:[#allocation14 + $0x3c] sm:$0xf]
    %v920 = vld [vmem:[#allocation14 + $0x40] sm:$0xf]
    %v921 = vld [vmem:[#allocation14 + $0x44] sm:$0xf]
    %v922 = vld [vmem:[#allocation14 + $0x48] sm:$0xf]
    %v923 = vld [vmem:[#allocation14 + $0x4c] sm:$0xf]
    %v924 = vld [vmem:[#allocation14 + $0x50] sm:$0xf]
    %v925 = vld [vmem:[#allocation14 + $0x54] sm:$0xf]
    %v926 = vld [vmem:[#allocation14 + $0x58] sm:$0xf]
    %v927 = vld [vmem:[#allocation14 + $0x5c] sm:$0xf]
    %v928 = vld [vmem:[#allocation14 + $0x60] sm:$0xf]
    %v929 = vld [vmem:[#allocation14 + $0x64] sm:$0xf]
    %v930 = vld [vmem:[#allocation14 + $0x68] sm:$0xf]
    %v931 = vld [vmem:[#allocation14 + $0x6c] sm:$0xf]
    %v932 = vld [vmem:[#allocation14 + $0x70] sm:$0xf]
    %v933 = vld [vmem:[#allocation14 + $0x74] sm:$0xf]
    %v934 = vld [vmem:[#allocation14 + $0x78] sm:$0xf]
    %v935 = vld [vmem:[#allocation14 + $0x7c] sm:$0xf]
    %v936 = vld [vmem:[#allocation14 + $0x80] sm:$0xf]
    %v937 = vld [vmem:[#allocation14 + $0x84] sm:$0xf]
    %v938 = vld [vmem:[#allocation14 + $0x88] sm:$0xf]
    %v939 = vld [vmem:[#allocation14 + $0x8c] sm:$0xf]
    %v940 = vld [vmem:[#allocation14 + $0x90] sm:$0xf]
    %v941 = vld [vmem:[#allocation14 + $0x94] sm:$0xf]
    %v942 = vld [vmem:[#allocation14 + $0x98] sm:$0xf]
    %v943 = vld [vmem:[#allocation14 + $0x9c] sm:$0xf]
    %v944 = vld [vmem:[#allocation14 + $0xa0] sm:$0xf]
    %v945 = vld [vmem:[#allocation14 + $0xa4] sm:$0xf]
    %v946 = vld [vmem:[#allocation14 + $0xa8] sm:$0xf]
    %v947 = vld [vmem:[#allocation14 + $0xac] sm:$0xf]
    %v948 = vld [vmem:[#allocation14 + $0xb0] sm:$0xf]
    %v949 = vld [vmem:[#allocation14 + $0xb4] sm:$0xf]
    %v950 = vld [vmem:[#allocation14 + $0xb8] sm:$0xf]
    %v951 = vld [vmem:[#allocation14 + $0xbc] sm:$0xf]
    %v952 = vld [vmem:[#allocation14 + $0xc0] sm:$0xf]
    %v953 = vld [vmem:[#allocation14 + $0xc4] sm:$0xf]
    %v954 = vld [vmem:[#allocation14 + $0xc8] sm:$0xf]
    %v955 = vld [vmem:[#allocation14 + $0xcc] sm:$0xf]
    %v956 = vld [vmem:[#allocation14 + $0xd0] sm:$0xf]
    %v957 = vld [vmem:[#allocation14 + $0xd4] sm:$0xf]
    %v958 = vld [vmem:[#allocation14 + $0xd8] sm:$0xf]
    %v959 = vld [vmem:[#allocation14 + $0xdc] sm:$0xf]
    %v960 = vld [vmem:[#allocation14 + $0xe0] sm:$0xf]
    %v961 = vld [vmem:[#allocation14 + $0xe4] sm:$0xf]
    %v962 = vld [vmem:[#allocation14 + $0xe8] sm:$0xf]
    %v963 = vld [vmem:[#allocation14 + $0xec] sm:$0xf]
    %v964 = vld [vmem:[#allocation14 + $0xf0] sm:$0xf]
    %v965 = vld [vmem:[#allocation14 + $0xf4] sm:$0xf]
    %v966 = vld [vmem:[#allocation14 + $0xf8] sm:$0xf]
    %v967 = vld [vmem:[#allocation14 + $0xfc] sm:$0xf]
    %v968 = vld [vmem:[#allocation14 + $0x100] sm:$0xf]
    %v969 = vld [vmem:[#allocation14 + $0x104] sm:$0xf]
    %v970 = vld [vmem:[#allocation14 + $0x108] sm:$0xf]
    %v971 = vld [vmem:[#allocation14 + $0x10c] sm:$0xf]
    %v972 = vld [vmem:[#allocation14 + $0x110] sm:$0xf]
    %v973 = vld [vmem:[#allocation14 + $0x114] sm:$0xf]
    %v974 = vld [vmem:[#allocation14 + $0x118] sm:$0xf]
    %v975 = vld [vmem:[#allocation14 + $0x11c] sm:$0xf]
    %v976 = vld [vmem:[#allocation14 + $0x120] sm:$0xf]
    %v977 = vld [vmem:[#allocation14 + $0x124] sm:$0xf]
    %v978 = vld [vmem:[#allocation14 + $0x128] sm:$0xf]
    %v979 = vld [vmem:[#allocation14 + $0x12c] sm:$0xf]
    %v980 = vld [vmem:[#allocation14 + $0x130] sm:$0xf]
    %v981 = vld [vmem:[#allocation14 + $0x134] sm:$0xf]
    %v982 = vld [vmem:[#allocation14 + $0x138] sm:$0xf]
    %v983 = vld [vmem:[#allocation14 + $0x13c] sm:$0xf]
    %v984 = vld [vmem:[#allocation14 + $0x140] sm:$0xf]
    %v985 = vld [vmem:[#allocation14 + $0x144] sm:$0xf]
    %v986 = vld [vmem:[#allocation14 + $0x148] sm:$0xf]
    %v987 = vld [vmem:[#allocation14 + $0x14c] sm:$0xf]
    %v988 = vld [vmem:[#allocation14 + $0x150] sm:$0xf]
    %v989 = vld [vmem:[#allocation14 + $0x154] sm:$0xf]
    %v990 = vld [vmem:[#allocation14 + $0x158] sm:$0xf]
    %v991 = vld [vmem:[#allocation14 + $0x15c] sm:$0xf]
    %v992 = vld [vmem:[#allocation14 + $0x160] sm:$0xf]
    %v993 = vld [vmem:[#allocation14 + $0x164] sm:$0xf]
    %v994 = vld [vmem:[#allocation14 + $0x168] sm:$0xf]
    %v995 = vld [vmem:[#allocation14 + $0x16c] sm:$0xf]
    %v996 = vld [vmem:[#allocation14 + $0x170] sm:$0xf]
    %v997 = vld [vmem:[#allocation14 + $0x174] sm:$0xf]
    %v998 = vld [vmem:[#allocation14 + $0x178] sm:$0xf]
    %v999 = vld [vmem:[#allocation14 + $0x17c] sm:$0xf]
    %v1000 = vld [vmem:[#allocation14 + $0x180] sm:$0xf]
    %v1001 = vld [vmem:[#allocation14 + $0x184] sm:$0xf]
    %v1002 = vld [vmem:[#allocation14 + $0x188] sm:$0xf]
    %v1003 = vld [vmem:[#allocation14 + $0x18c] sm:$0xf]
    %v1004 = vld [vmem:[#allocation14 + $0x190] sm:$0xf]
    %v1005 = vld [vmem:[#allocation14 + $0x194] sm:$0xf]
    %v1006 = vld [vmem:[#allocation14 + $0x198] sm:$0xf]
    %v1007 = vld [vmem:[#allocation14 + $0x19c] sm:$0xf]
    %v1008 = vld [vmem:[#allocation14 + $0x1a0] sm:$0xf]
    %v1009 = vld [vmem:[#allocation14 + $0x1a4] sm:$0xf]
    %v1010 = vld [vmem:[#allocation14 + $0x1a8] sm:$0xf]
    %v1011 = vld [vmem:[#allocation14 + $0x1ac] sm:$0xf]
    %v1012 = vld [vmem:[#allocation14 + $0x1b0] sm:$0xf]
    %v1013 = vld [vmem:[#allocation14 + $0x1b4] sm:$0xf]
    %v1014 = vld [vmem:[#allocation14 + $0x1b8] sm:$0xf]
    %v1015 = vld [vmem:[#allocation14 + $0x1bc] sm:$0xf]
    %v1016 = vld [vmem:[#allocation14 + $0x1c0] sm:$0xf]
    %v1017 = vld [vmem:[#allocation14 + $0x1c4] sm:$0xf]
    %v1018 = vld [vmem:[#allocation14 + $0x1c8] sm:$0xf]
    %v1019 = vld [vmem:[#allocation14 + $0x1cc] sm:$0xf]
    %v1020 = vld [vmem:[#allocation14 + $0x1d0] sm:$0xf]
    %v1021 = vld [vmem:[#allocation14 + $0x1d4] sm:$0xf]
    %v1022 = vld [vmem:[#allocation14 + $0x1d8] sm:$0xf]
    %v1023 = vld [vmem:[#allocation14 + $0x1dc] sm:$0xf]
    %v1024 = vld [vmem:[#allocation14 + $0x1e0] sm:$0xf]
    %v1025 = vld [vmem:[#allocation14 + $0x1e4] sm:$0xf]
    %v1026 = vld [vmem:[#allocation14 + $0x1e8] sm:$0xf]
    %v1027 = vld [vmem:[#allocation14 + $0x1ec] sm:$0xf]
    %v1028 = vld [vmem:[#allocation14 + $0x1f0] sm:$0xf]
    %v1029 = vld [vmem:[#allocation14 + $0x1f4] sm:$0xf]
    %v1030 = vld [vmem:[#allocation14 + $0x1f8] sm:$0xf]
    %v1031 = vld [vmem:[#allocation14 + $0x1fc] sm:$0xf]
    %v1160 = vunpack.c.l.b16 %v904
    %v1161 = vunpack.c.l.b16 %v905
    %v1162 = vunpack.c.l.b16 %v906
    %v1163 = vunpack.c.l.b16 %v907
    %v1164 = vunpack.c.l.b16 %v908
    %v1165 = vunpack.c.l.b16 %v909
    %v1166 = vunpack.c.l.b16 %v910
    %v1167 = vunpack.c.l.b16 %v911
    %v1168 = vunpack.c.l.b16 %v912
    %v1169 = vunpack.c.l.b16 %v913
    %v1170 = vunpack.c.l.b16 %v914
    %v1171 = vunpack.c.l.b16 %v915
    %v1172 = vunpack.c.l.b16 %v916
    %v1173 = vunpack.c.l.b16 %v917
    %v1174 = vunpack.c.l.b16 %v918
    %v1175 = vunpack.c.l.b16 %v919
    %v1176 = vunpack.c.l.b16 %v920
    %v1177 = vunpack.c.l.b16 %v921
    %v1178 = vunpack.c.l.b16 %v922
    %v1179 = vunpack.c.l.b16 %v923
    %v1180 = vunpack.c.l.b16 %v924
    %v1181 = vunpack.c.l.b16 %v925
    %v1182 = vunpack.c.l.b16 %v926
    %v1183 = vunpack.c.l.b16 %v927
    %v1184 = vunpack.c.l.b16 %v928
    %v1185 = vunpack.c.l.b16 %v929
    %v1186 = vunpack.c.l.b16 %v930
    %v1187 = vunpack.c.l.b16 %v931
    %v1188 = vunpack.c.l.b16 %v932
    %v1189 = vunpack.c.l.b16 %v933
    %v1190 = vunpack.c.l.b16 %v934
    %v1191 = vunpack.c.l.b16 %v935
    %v1192 = vunpack.c.l.b16 %v936
    %v1193 = vunpack.c.l.b16 %v937
    %v1194 = vunpack.c.l.b16 %v938
    %v1195 = vunpack.c.l.b16 %v939
    %v1196 = vunpack.c.l.b16 %v940
    %v1197 = vunpack.c.l.b16 %v941
    %v1198 = vunpack.c.l.b16 %v942
    %v1199 = vunpack.c.l.b16 %v943
    %v1200 = vunpack.c.l.b16 %v944
    %v1201 = vunpack.c.l.b16 %v945
    %v1202 = vunpack.c.l.b16 %v946
    %v1203 = vunpack.c.l.b16 %v947
    %v1204 = vunpack.c.l.b16 %v948
    %v1205 = vunpack.c.l.b16 %v949
    %v1206 = vunpack.c.l.b16 %v950
    %v1207 = vunpack.c.l.b16 %v951
    %v1208 = vunpack.c.l.b16 %v952
    %v1209 = vunpack.c.l.b16 %v953
    %v1210 = vunpack.c.l.b16 %v954
    %v1211 = vunpack.c.l.b16 %v955
    %v1212 = vunpack.c.l.b16 %v956
    %v1213 = vunpack.c.l.b16 %v957
    %v1214 = vunpack.c.l.b16 %v958
    %v1215 = vunpack.c.l.b16 %v959
    %v1216 = vunpack.c.l.b16 %v960
    %v1217 = vunpack.c.l.b16 %v961
    %v1218 = vunpack.c.l.b16 %v962
    %v1219 = vunpack.c.l.b16 %v963
    %v1220 = vunpack.c.l.b16 %v964
    %v1221 = vunpack.c.l.b16 %v965
    %v1222 = vunpack.c.l.b16 %v966
    %v1223 = vunpack.c.l.b16 %v967
    %v1224 = vunpack.c.l.b16 %v968
    %v1225 = vunpack.c.l.b16 %v969
    %v1226 = vunpack.c.l.b16 %v970
    %v1227 = vunpack.c.l.b16 %v971
    %v1228 = vunpack.c.l.b16 %v972
    %v1229 = vunpack.c.l.b16 %v973
    %v1230 = vunpack.c.l.b16 %v974
    %v1231 = vunpack.c.l.b16 %v975
    %v1232 = vunpack.c.l.b16 %v976
    %v1233 = vunpack.c.l.b16 %v977
    %v1234 = vunpack.c.l.b16 %v978
    %v1235 = vunpack.c.l.b16 %v979
    %v1236 = vunpack.c.l.b16 %v980
    %v1237 = vunpack.c.l.b16 %v981
    %v1238 = vunpack.c.l.b16 %v982
    %v1239 = vunpack.c.l.b16 %v983
    %v1240 = vunpack.c.l.b16 %v984
    %v1241 = vunpack.c.l.b16 %v985
    %v1242 = vunpack.c.l.b16 %v986
    %v1243 = vunpack.c.l.b16 %v987
    %v1244 = vunpack.c.l.b16 %v988
    %v1245 = vunpack.c.l.b16 %v989
    %v1246 = vunpack.c.l.b16 %v990
    %v1247 = vunpack.c.l.b16 %v991
    %v1248 = vunpack.c.l.b16 %v992
    %v1249 = vunpack.c.l.b16 %v993
    %v1250 = vunpack.c.l.b16 %v994
    %v1251 = vunpack.c.l.b16 %v995
    %v1252 = vunpack.c.l.b16 %v996
    %v1253 = vunpack.c.l.b16 %v997
    %v1254 = vunpack.c.l.b16 %v998
    %v1255 = vunpack.c.l.b16 %v999
    %v1256 = vunpack.c.l.b16 %v1000
    %v1257 = vunpack.c.l.b16 %v1001
    %v1258 = vunpack.c.l.b16 %v1002
    %v1259 = vunpack.c.l.b16 %v1003
    %v1260 = vunpack.c.l.b16 %v1004
    %v1261 = vunpack.c.l.b16 %v1005
    %v1262 = vunpack.c.l.b16 %v1006
    %v1263 = vunpack.c.l.b16 %v1007
    %v1264 = vunpack.c.l.b16 %v1008
    %v1265 = vunpack.c.l.b16 %v1009
    %v1266 = vunpack.c.l.b16 %v1010
    %v1267 = vunpack.c.l.b16 %v1011
    %v1268 = vunpack.c.l.b16 %v1012
    %v1269 = vunpack.c.l.b16 %v1013
    %v1270 = vunpack.c.l.b16 %v1014
    %v1271 = vunpack.c.l.b16 %v1015
    %v1272 = vunpack.c.l.b16 %v1016
    %v1273 = vunpack.c.l.b16 %v1017
    %v1274 = vunpack.c.l.b16 %v1018
    %v1275 = vunpack.c.l.b16 %v1019
    %v1276 = vunpack.c.l.b16 %v1020
    %v1277 = vunpack.c.l.b16 %v1021
    %v1278 = vunpack.c.l.b16 %v1022
    %v1279 = vunpack.c.l.b16 %v1023
    %v1280 = vunpack.c.l.b16 %v1024
    %v1281 = vunpack.c.l.b16 %v1025
    %v1282 = vunpack.c.l.b16 %v1026
    %v1283 = vunpack.c.l.b16 %v1027
    %v1284 = vunpack.c.l.b16 %v1028
    %v1285 = vunpack.c.l.b16 %v1029
    %v1286 = vunpack.c.l.b16 %v1030
    %v1287 = vunpack.c.l.b16 %v1031
    %v1288 = vpack.c.b16 %v1161, %v1160
    %v1289 = vpack.c.b16 %v1163, %v1162
    %v1290 = vpack.c.b16 %v1165, %v1164
    %v1291 = vpack.c.b16 %v1167, %v1166
    %v1292 = vpack.c.b16 %v1169, %v1168
    %v1293 = vpack.c.b16 %v1171, %v1170
    %v1294 = vpack.c.b16 %v1173, %v1172
    %v1295 = vpack.c.b16 %v1175, %v1174
    %v1296 = vpack.c.b16 %v1177, %v1176
    %v1297 = vpack.c.b16 %v1179, %v1178
    %v1298 = vpack.c.b16 %v1181, %v1180
    %v1299 = vpack.c.b16 %v1183, %v1182
    %v1300 = vpack.c.b16 %v1185, %v1184
    %v1301 = vpack.c.b16 %v1187, %v1186
    %v1302 = vpack.c.b16 %v1189, %v1188
    %v1303 = vpack.c.b16 %v1191, %v1190
    %v1304 = vpack.c.b16 %v1193, %v1192
    %v1305 = vpack.c.b16 %v1195, %v1194
    %v1306 = vpack.c.b16 %v1197, %v1196
    %v1307 = vpack.c.b16 %v1199, %v1198
    %v1308 = vpack.c.b16 %v1201, %v1200
    %v1309 = vpack.c.b16 %v1203, %v1202
    %v1310 = vpack.c.b16 %v1205, %v1204
    %v1311 = vpack.c.b16 %v1207, %v1206
    %v1312 = vpack.c.b16 %v1209, %v1208
    %v1313 = vpack.c.b16 %v1211, %v1210
    %v1314 = vpack.c.b16 %v1213, %v1212
    %v1315 = vpack.c.b16 %v1215, %v1214
    %v1316 = vpack.c.b16 %v1217, %v1216
    %v1317 = vpack.c.b16 %v1219, %v1218
    %v1318 = vpack.c.b16 %v1221, %v1220
    %v1319 = vpack.c.b16 %v1223, %v1222
    %v1320 = vpack.c.b16 %v1225, %v1224
    %v1321 = vpack.c.b16 %v1227, %v1226
    %v1322 = vpack.c.b16 %v1229, %v1228
    %v1323 = vpack.c.b16 %v1231, %v1230
    %v1324 = vpack.c.b16 %v1233, %v1232
    %v1325 = vpack.c.b16 %v1235, %v1234
    %v1326 = vpack.c.b16 %v1237, %v1236
    %v1327 = vpack.c.b16 %v1239, %v1238
    %v1328 = vpack.c.b16 %v1241, %v1240
    %v1329 = vpack.c.b16 %v1243, %v1242
    %v1330 = vpack.c.b16 %v1245, %v1244
    %v1331 = vpack.c.b16 %v1247, %v1246
    %v1332 = vpack.c.b16 %v1249, %v1248
    %v1333 = vpack.c.b16 %v1251, %v1250
    %v1334 = vpack.c.b16 %v1253, %v1252
    %v1335 = vpack.c.b16 %v1255, %v1254
    %v1336 = vpack.c.b16 %v1257, %v1256
    %v1337 = vpack.c.b16 %v1259, %v1258
    %v1338 = vpack.c.b16 %v1261, %v1260
    %v1339 = vpack.c.b16 %v1263, %v1262
    %v1340 = vpack.c.b16 %v1265, %v1264
    %v1341 = vpack.c.b16 %v1267, %v1266
    %v1342 = vpack.c.b16 %v1269, %v1268
    %v1343 = vpack.c.b16 %v1271, %v1270
    %v1344 = vpack.c.b16 %v1273, %v1272
    %v1345 = vpack.c.b16 %v1275, %v1274
    %v1346 = vpack.c.b16 %v1277, %v1276
    %v1347 = vpack.c.b16 %v1279, %v1278
    %v1348 = vpack.c.b16 %v1281, %v1280
    %v1349 = vpack.c.b16 %v1283, %v1282
    %v1350 = vpack.c.b16 %v1285, %v1284
    %v1351 = vpack.c.b16 %v1287, %v1286
    %1416 = vmatprep.subr.bf16.mxu0 0
    %1417 = vmatpush1.bf16.msra.mxu0 %v1295
    %1418 = vmatprep.subr.bf16.mxu0 0
    %1419 = vmatpush1.bf16.msra.mxu0 %v1294
    %1420 = vmatprep.subr.bf16.mxu0 0
    %1421 = vmatpush1.bf16.msra.mxu0 %v1293
    %1422 = vmatprep.subr.bf16.mxu0 0
    %1423 = vmatpush1.bf16.msra.mxu0 %v1292
    %1424 = vmatprep.subr.bf16.mxu0 0
    %1425 = vmatpush1.bf16.msra.mxu0 %v1291
    %1426 = vmatprep.subr.bf16.mxu0 0
    %1427 = vmatpush1.bf16.msra.mxu0 %v1290
    %1428 = vmatprep.subr.bf16.mxu0 0
    %1429 = vmatpush1.bf16.msra.mxu0 %v1289
    %1430 = vmatprep.subr.bf16.mxu0 0
    %1431 = vmatpush1.bf16.msra.mxu0 %v1288
    %1432 = vmatprep.subr.bf16.mxu0 0
    %1433 = vmatpush2.bf16.msra.mxu0 %v1303
    %1434 = vmatprep.subr.bf16.mxu0 0
    %1435 = vmatpush2.bf16.msra.mxu0 %v1302
    %1436 = vmatprep.subr.bf16.mxu0 0
    %1437 = vmatpush2.bf16.msra.mxu0 %v1301
    %1438 = vmatprep.subr.bf16.mxu0 0
    %1439 = vmatpush2.bf16.msra.mxu0 %v1300
    %1440 = vmatprep.subr.bf16.mxu0 0
    %1441 = vmatpush2.bf16.msra.mxu0 %v1299
    %1442 = vmatprep.subr.bf16.mxu0 0
    %1443 = vmatpush2.bf16.msra.mxu0 %v1298
    %1444 = vmatprep.subr.bf16.mxu0 0
    %1445 = vmatpush2.bf16.msra.mxu0 %v1297
    %1446 = vmatprep.subr.bf16.mxu0 0
    %1447 = vmatpush2.bf16.msra.mxu0 %v1296
    %1448 = vmatprep.mubr.bf16.mxu0 %v897
    %1449 = vmatmul.mubr.bf16.gmra.mxu0 %v896
    %v1450 = vpop.f32.mrf.mxu0
    %v1451 = vadd.f32 0.0, %v1450
    %v1452 = vpop.f32.mrf.mxu0
    %v1453 = vpop.f32.mrf.mxu0
    %v1454 = vadd.f32 0.0, %v1453
    %v1455 = vpop.f32.mrf.mxu0
    %1456 = vdwg.mxu0
    %1457 = vmatprep.subr.bf16.mxu0 0
    %1458 = vmatpush1.bf16.msra.mxu0 %v1311
    %1459 = vmatprep.subr.bf16.mxu0 0
    %1460 = vmatpush1.bf16.msra.mxu0 %v1310
    %1461 = vmatprep.subr.bf16.mxu0 0
    %1462 = vmatpush1.bf16.msra.mxu0 %v1309
    %1463 = vmatprep.subr.bf16.mxu0 0
    %1464 = vmatpush1.bf16.msra.mxu0 %v1308
    %1465 = vmatprep.subr.bf16.mxu0 0
    %1466 = vmatpush1.bf16.msra.mxu0 %v1307
    %1467 = vmatprep.subr.bf16.mxu0 0
    %1468 = vmatpush1.bf16.msra.mxu0 %v1306
    %1469 = vmatprep.subr.bf16.mxu0 0
    %1470 = vmatpush1.bf16.msra.mxu0 %v1305
    %1471 = vmatprep.subr.bf16.mxu0 0
    %1472 = vmatpush1.bf16.msra.mxu0 %v1304
    %1473 = vmatprep.subr.bf16.mxu0 0
    %1474 = vmatpush2.bf16.msra.mxu0 %v1319
    %1475 = vmatprep.subr.bf16.mxu0 0
    %1476 = vmatpush2.bf16.msra.mxu0 %v1318
    %1477 = vmatprep.subr.bf16.mxu0 0
    %1478 = vmatpush2.bf16.msra.mxu0 %v1317
    %1479 = vmatprep.subr.bf16.mxu0 0
    %1480 = vmatpush2.bf16.msra.mxu0 %v1316
    %1481 = vmatprep.subr.bf16.mxu0 0
    %1482 = vmatpush2.bf16.msra.mxu0 %v1315
    %1483 = vmatprep.subr.bf16.mxu0 0
    %1484 = vmatpush2.bf16.msra.mxu0 %v1314
    %1485 = vmatprep.subr.bf16.mxu0 0
    %1486 = vmatpush2.bf16.msra.mxu0 %v1313
    %1487 = vmatprep.subr.bf16.mxu0 0
    %1488 = vmatpush2.bf16.msra.mxu0 %v1312
    %1489 = vmatprep.mubr.bf16.mxu0 %v899
    %1490 = vmatmul.mubr.bf16.gmra.mxu0 %v898
    %v1491 = vpop.f32.mrf.mxu0
    %v1492 = vadd.f32 %v1451, %v1491
    %v1493 = vpop.f32.mrf.mxu0
    %v1494 = vpop.f32.mrf.mxu0
    %v1495 = vadd.f32 %v1454, %v1494
    %v1496 = vpop.f32.mrf.mxu0
    %1497 = vdwg.mxu0
    %1498 = vmatprep.subr.bf16.mxu0 0
    %1499 = vmatpush1.bf16.msra.mxu0 %v1327
    %1500 = vmatprep.subr.bf16.mxu0 0
    %1501 = vmatpush1.bf16.msra.mxu0 %v1326
    %1502 = vmatprep.subr.bf16.mxu0 0
    %1503 = vmatpush1.bf16.msra.mxu0 %v1325
    %1504 = vmatprep.subr.bf16.mxu0 0
    %1505 = vmatpush1.bf16.msra.mxu0 %v1324
    %1506 = vmatprep.subr.bf16.mxu0 0
    %1507 = vmatpush1.bf16.msra.mxu0 %v1323
    %1508 = vmatprep.subr.bf16.mxu0 0
    %1509 = vmatpush1.bf16.msra.mxu0 %v1322
    %1510 = vmatprep.subr.bf16.mxu0 0
    %1511 = vmatpush1.bf16.msra.mxu0 %v1321
    %1512 = vmatprep.subr.bf16.mxu0 0
    %1513 = vmatpush1.bf16.msra.mxu0 %v1320
    %1514 = vmatprep.subr.bf16.mxu0 0
    %1515 = vmatpush2.bf16.msra.mxu0 %v1335
    %1516 = vmatprep.subr.bf16.mxu0 0
    %1517 = vmatpush2.bf16.msra.mxu0 %v1334
    %1518 = vmatprep.subr.bf16.mxu0 0
    %1519 = vmatpush2.bf16.msra.mxu0 %v1333
    %1520 = vmatprep.subr.bf16.mxu0 0
    %1521 = vmatpush2.bf16.msra.mxu0 %v1332
    %1522 = vmatprep.subr.bf16.mxu0 0
    %1523 = vmatpush2.bf16.msra.mxu0 %v1331
    %1524 = vmatprep.subr.bf16.mxu0 0
    %1525 = vmatpush2.bf16.msra.mxu0 %v1330
    %1526 = vmatprep.subr.bf16.mxu0 0
    %1527 = vmatpush2.bf16.msra.mxu0 %v1329
    %1528 = vmatprep.subr.bf16.mxu0 0
    %1529 = vmatpush2.bf16.msra.mxu0 %v1328
    %1530 = vmatprep.mubr.bf16.mxu0 %v901
    %1531 = vmatmul.mubr.bf16.gmra.mxu0 %v900
    %v1532 = vpop.f32.mrf.mxu0
    %v1533 = vadd.f32 %v1492, %v1532
    %v1534 = vpop.f32.mrf.mxu0
    %v1535 = vpop.f32.mrf.mxu0
    %v1536 = vadd.f32 %v1495, %v1535
    %v1537 = vpop.f32.mrf.mxu0
    %1538 = vdwg.mxu0
    %1539 = vmatprep.subr.bf16.mxu0 0
    %1540 = vmatpush1.bf16.msra.mxu0 %v1343
    %1541 = vmatprep.subr.bf16.mxu0 0
    %1542 = vmatpush1.bf16.msra.mxu0 %v1342
    %1543 = vmatprep.subr.bf16.mxu0 0
    %1544 = vmatpush1.bf16.msra.mxu0 %v1341
    %1545 = vmatprep.subr.bf16.mxu0 0
    %1546 = vmatpush1.bf16.msra.mxu0 %v1340
    %1547 = vmatprep.subr.bf16.mxu0 0
    %1548 = vmatpush1.bf16.msra.mxu0 %v1339
    %1549 = vmatprep.subr.bf16.mxu0 0
    %1550 = vmatpush1.bf16.msra.mxu0 %v1338
    %1551 = vmatprep.subr.bf16.mxu0 0
    %1552 = vmatpush1.bf16.msra.mxu0 %v1337
    %1553 = vmatprep.subr.bf16.mxu0 0
    %1554 = vmatpush1.bf16.msra.mxu0 %v1336
    %1555 = vmatprep.subr.bf16.mxu0 0
    %1556 = vmatpush2.bf16.msra.mxu0 %v1351
    %1557 = vmatprep.subr.bf16.mxu0 0
    %1558 = vmatpush2.bf16.msra.mxu0 %v1350
    %1559 = vmatprep.subr.bf16.mxu0 0
    %1560 = vmatpush2.bf16.msra.mxu0 %v1349
    %1561 = vmatprep.subr.bf16.mxu0 0
    %1562 = vmatpush2.bf16.msra.mxu0 %v1348
    %1563 = vmatprep.subr.bf16.mxu0 0
    %1564 = vmatpush2.bf16.msra.mxu0 %v1347
    %1565 = vmatprep.subr.bf16.mxu0 0
    %1566 = vmatpush2.bf16.msra.mxu0 %v1346
    %1567 = vmatprep.subr.bf16.mxu0 0
    %1568 = vmatpush2.bf16.msra.mxu0 %v1345
    %1569 = vmatprep.subr.bf16.mxu0 0
    %1570 = vmatpush2.bf16.msra.mxu0 %v1344
    %1571 = vmatprep.mubr.bf16.mxu0 %v903
    %1572 = vmatmul.mubr.bf16.gmra.mxu0 %v902
    %v1573 = vpop.f32.mrf.mxu0
    %v1574 = vadd.f32 %v1533, %v1573
    %v1575 = vpop.f32.mrf.mxu0
    %v1576 = vpop.f32.mrf.mxu0
    %v1577 = vadd.f32 %v1536, %v1576
    %v1578 = vpop.f32.mrf.mxu0
    %1579 = vdwg.mxu0
    %v1580 = vadd.f32 %v874, %v1574
    %v1581 = vadd.f32 %v877, %v1577
    %v1582 = vld [vmem:[%s6] sm:$0x1]
    %v1584 = vlaneseq
    %v1585 = vshrl.u32 %v1584, 7
    %v1586 = vsub.s32 0, %v1585
    %v1587 = vrot.slane %v1582, %v1586
    %v1589 = vadd.f32 %v1580, %v1587
    %v1590 = vadd.f32 %v1581, %v1587
    %s1591 = smul.u32 0, 128
    %v1592 = vlaneseq
    %v1593 = vand.u32 %v1592, 127
    %v1594 = vstv %s1591
    %v1595 = vadd.s32 %v1594, %v1593
    %1596 = vmax.xlane.f32.xlu0 %v1589
    %v1597 = vpop.xlane.xlu0 %1596
    %1598 = vmax.xlane.f32.xlu0 %v1590
    %v1599 = vpop.xlane.xlu0 %1598
    %v1600 = vld [vmem:[#allocation2] sm:$0xff]
    %v1601 = vld [vmem:[#allocation2 + $0x8] sm:$0xff]
    %v1602 = vmax.f32 %v1600, %v1597
    %v1603 = vmax.f32 %v1601, %v1599
    %vm1604 = vcmp.eq.f32.partialorder %v1589, %v1597
    %vm1605 = vcmp.eq.f32.partialorder %v1590, %v1599
    %v1606 = vsel %vm1604, %v1595, 2147483647
    %v1607 = vsel %vm1605, %v1595, 2147483647
    %v1608 = vand.u32 %v1606, 65535
    %v1609 = vshra.s32 %v1606, 16
    %v1610 = vcvt.s32.f32 %v1608
    %v1611 = vcvt.s32.f32 %v1609
    %1612 = vmin.xlane.f32.xlu0 %v1611
    %v1613 = vpop.xlane.xlu0 %1612
    %vm1614 = vcmp.eq.f32.partialorder %v1611, %v1613
    %v1615 = vsel %vm1614, %v1610, inf
    %1616 = vmin.xlane.f32.xlu0 %v1615
    %v1617 = vpop.xlane.xlu0 %1616
    %v1618 = vcvt.f32.s32 %v1617
    %v1619 = vcvt.f32.s32 %v1613
    %v1620 = vshll.u32 %v1619, 16
    %v1621 = vadd.s32 %v1620, %v1618
    %v1622 = vand.u32 %v1607, 65535
    %v1623 = vshra.s32 %v1607, 16
    %v1624 = vcvt.s32.f32 %v1622
    %v1625 = vcvt.s32.f32 %v1623
    %1626 = vmin.xlane.f32.xlu0 %v1625
    %v1627 = vpop.xlane.xlu0 %1626
    %vm1628 = vcmp.eq.f32.partialorder %v1625, %v1627
    %v1629 = vsel %vm1628, %v1624, inf
    %1630 = vmin.xlane.f32.xlu0 %v1629
    %v1631 = vpop.xlane.xlu0 %1630
    %v1632 = vcvt.f32.s32 %v1631
    %v1633 = vcvt.f32.s32 %v1627
    %v1634 = vshll.u32 %v1633, 16
    %v1635 = vadd.s32 %v1634, %v1632
    %vm1636 = vcmp.gt.f32.partialorder %v1597, %v1600
    %vm1637 = vcmp.gt.f32.partialorder %v1599, %v1601
    %v1638 = vld [vmem:[#allocation6] sm:$0xff]
    %v1639 = vld [vmem:[#allocation6 + $0x8] sm:$0xff]
    %v1640 = vsel %vm1636, %v1621, %v1638
    %v1641 = vsel %vm1637, %v1635, %v1639
    %vm1642 = vcmask 7168
    %1643 = vst.msk [vmem:[#allocation6] sm:$0xff] %vm1642, %v1640
    %1644 = vst.msk [vmem:[#allocation6 + $0x8] sm:$0xff] %vm1642, %v1641
    %v1645 = vld [vmem:[#allocation3] sm:$0xff]
    %v1646 = vld [vmem:[#allocation3 + $0x8] sm:$0xff]
    %v1647 = vsub.f32 %v1600, %v1602
    %v1648 = vsub.f32 %v1601, %v1603
    %v1649 = vmul.f32 %v1647, 1.442695
    %v1650 = vpow.pop %v1649
    %v1651 = vmul.f32 %v1648, 1.442695
    %v1652 = vpow.pop %v1651
    %v1653 = vmul.f32 %v1645, %v1650
    %v1654 = vmul.f32 %v1646, %v1652
    %1656 = vset.pattern.permute.xlu0 0
    %1657 = vperm.xlu0 %1656, %v1602
    %v1658 = vpop.permute.xlu0 %1657
    %1661 = vset.pattern.permute.xlu0 0
    %1662 = vperm.xlu0 %1661, %v1603
    %v1663 = vpop.permute.xlu0 %1662
    %v1665 = vsub.f32 %v1589, %v1658
    %v1666 = vsub.f32 %v1590, %v1663
    %v1667 = vmul.f32 %v1665, 1.442695
    %v1668 = vpow.pop %v1667
    %v1669 = vmul.f32 %v1666, 1.442695
    %v1670 = vpow.pop %v1669
    %1671 = vadd.xlane.f32.xlu0 %v1668
    %v1672 = vpop.xlane.xlu0 %1671
    %1673 = vadd.xlane.f32.xlu0 %v1670
    %v1674 = vpop.xlane.xlu0 %1673
    %v1675 = vadd.f32 %v1653, %v1672
    %v1676 = vadd.f32 %v1654, %v1674
    %1677 = vst.msk [vmem:[#allocation3] sm:$0xff] %vm1642, %v1675
    %1678 = vst.msk [vmem:[#allocation3 + $0x8] sm:$0xff] %vm1642, %v1676
    %1679 = vst.msk [vmem:[#allocation2] sm:$0xff] %vm1642, %v1602
    %1680 = vst.msk [vmem:[#allocation2 + $0x8] sm:$0xff] %vm1642, %v1603
    %vm1681 = vcmp.lt.s32.totalorder %v1595, 64
    %v1682 = vsel %vm1681, 1, 0
    %vm1683 = vcmp.eq.s32.totalorder %v1682, 1
    %v1684 = vsel %vm1683, %v1589, inf
    %v1685 = vsel %vm1683, %v1590, inf
    %1686 = vmin.xlane.f32.xlu0 %v1684
    %v1687 = vpop.xlane.xlu0 %1686
    %1688 = vmin.xlane.f32.xlu0 %v1685
    %v1689 = vpop.xlane.xlu0 %1688
    %v1690 = vld [vmem:[#allocation4] sm:$0xff]
    %v1691 = vld [vmem:[#allocation4 + $0x8] sm:$0xff]
    %v1692 = vmin.f32 %v1690, %v1687
    %v1693 = vmin.f32 %v1691, %v1689
    %1694 = vst.msk [vmem:[#allocation4] sm:$0xff] %vm1642, %v1692
    %1695 = vst.msk [vmem:[#allocation4 + $0x8] sm:$0xff] %vm1642, %v1693
    %v1696 = vld [vmem:[#allocation5] sm:$0xff]
    %v1697 = vld [vmem:[#allocation5 + $0x8] sm:$0xff]
    %v1698 = vld [vmem:[%s7] sm:$0xff]
    %v1699 = vld [vmem:[%s7 + $0x8] sm:$0xff]
    %1700 = vset.pattern.permute.xlu0 0
    %1701 = vperm.xlu0 %1700, %v1698
    %v1702 = vpop.permute.xlu0 %1701
    %1703 = vset.pattern.permute.xlu0 0
    %1704 = vperm.xlu0 %1703, %v1699
    %v1705 = vpop.permute.xlu0 %1704
    %vm1706 = vcmp.eq.s32.totalorder %v1595, %v1702
    %vm1707 = vcmp.eq.s32.totalorder %v1595, %v1705
    %v1708 = vsel %vm1706, %v1589, 0.0
    %v1709 = vsel %vm1707, %v1590, 0.0
    %1710 = vadd.xlane.f32.xlu0 %v1708
    %v1711 = vpop.xlane.xlu0 %1710
    %1712 = vadd.xlane.f32.xlu0 %v1709
    %v1713 = vpop.xlane.xlu0 %1712
    %v1714 = vadd.f32 %v1696, %v1711
    %v1715 = vadd.f32 %v1697, %v1713
    %1716 = vst.msk [vmem:[#allocation5] sm:$0xff] %vm1642, %v1714
    %1717 = vst.msk [vmem:[#allocation5 + $0x8] sm:$0xff] %vm1642, %v1715
    // Predicated region
    $region58: #{tpu_custom_call.1} parent=1 // pred_check
      %p1718 = pneg %p101
    $region59: #{tpu_custom_call.1} parent=1 // pred_check_branch
      %1720 = sbr.rel (%p1718) target = $region61
    $region60: #{tpu_custom_call.1} parent=1 // pred_region
      %v1721 = vld [vmem:[#allocation6] sm:$0xff]
      %v1722 = vld [vmem:[#allocation6 + $0x8] sm:$0xff]
      %1723 = vst.msk [vmem:[%s8] sm:$0xff] %vm1642, %v1721
      %1724 = vst.msk [vmem:[%s8 + $0x8] sm:$0xff] %vm1642, %v1722
      %v1725 = vld [vmem:[#allocation3] sm:$0xff]
      %v1726 = vld [vmem:[#allocation3 + $0x8] sm:$0xff]
      %v1727 = vlog2.pop %v1725
      %v1728 = vmul.f32 %v1727, 0.6931472
      %v1729 = vlog2.pop %v1726
      %v1730 = vmul.f32 %v1729, 0.6931472
      %v1731 = vld [vmem:[#allocation5] sm:$0xff]
      %v1732 = vld [vmem:[#allocation5 + $0x8] sm:$0xff]
      %v1733 = vld [vmem:[#allocation2] sm:$0xff]
      %v1734 = vld [vmem:[#allocation2 + $0x8] sm:$0xff]
      %v1735 = vsub.f32 %v1731, %v1733
      %v1736 = vsub.f32 %v1732, %v1734
      %v1737 = vsub.f32 %v1735, %v1728
      %v1738 = vsub.f32 %v1736, %v1730
      %1739 = vst.msk [vmem:[%s9] sm:$0xff] %vm1642, %v1737
      %1740 = vst.msk [vmem:[%s9 + $0x8] sm:$0xff] %vm1642, %v1738
      %v1741 = vld [vmem:[#allocation3] sm:$0xff]
      %v1742 = vld [vmem:[#allocation3 + $0x8] sm:$0xff]
      %v1743 = vrcp.pop %v1741
      %v1744 = vrcp.pop %v1742
      %v1745 = vld [vmem:[#allocation4] sm:$0xff]
      %v1746 = vld [vmem:[#allocation4 + $0x8] sm:$0xff]
      %v1747 = vld [vmem:[#allocation2] sm:$0xff]
      %v1748 = vld [vmem:[#allocation2 + $0x8] sm:$0xff]
      %v1749 = vsub.f32 %v1745, %v1747
      %v1750 = vsub.f32 %v1746, %v1748
      %v1751 = vmul.f32 %v1749, 1.442695
      %v1752 = vpow.pop %v1751
      %v1753 = vmul.f32 %v1750, 1.442695
      %v1754 = vpow.pop %v1753
      %v1755 = vmul.f32 %v1752, %v1743
      %v1756 = vmul.f32 %v1754, %v1744
      %1757 = vst.msk [vmem:[%s10] sm:$0xff] %vm1642, %v1755
      %1758 = vst.msk [vmem:[%s10 + $0x8] sm:$0xff] %vm1642, %v1756
    $region61: #{tpu_custom_call.1} parent=1 // pred_fallthru
      _
    // Predicated region
    $region62: #{tpu_custom_call.1} parent=1 // pred_check
      _
    $region63: #{tpu_custom_call.1} parent=1 // pred_check_branch
      %1760 = sbr.rel (0) target = $region65
    $region64: #{tpu_custom_call.1} parent=1 // pred_region
      _
    $region65: #{tpu_custom_call.1} parent=1 // pred_fallthru
      _
    // Predicated region
    $region66: #{tpu_custom_call.1} parent=1 // pred_check
      _
    $region67: #{tpu_custom_call.1} parent=1 // pred_check_branch
      %1762 = sbr.rel (0) target = $region69
    $region68: #{tpu_custom_call.1} parent=1 // pred_region
      _
    $region69: #{tpu_custom_call.1} parent=1 // pred_fallthru
      _
    // Predicated region
    $region70: #{tpu_custom_call.1} parent=1 // pred_check
      _
    $region71: #{tpu_custom_call.1} parent=1 // pred_check_branch
      %1764 = sbr.rel (0) target = $region73
    $region72: #{tpu_custom_call.1} parent=1 // pred_region
      _
    $region73: #{tpu_custom_call.1} parent=1 // pred_fallthru
      _
    // Predicated region
    $region74: #{tpu_custom_call.1} parent=1 // pred_check
      _
    $region75: #{tpu_custom_call.1} parent=1 // pred_check_branch
      %1766 = sbr.rel (0) target = $region77
    $region76: #{tpu_custom_call.1} parent=1 // pred_region
      _
    $region77: #{tpu_custom_call.1} parent=1 // pred_fallthru
      _
    // Predicated region
    $region78: #{tpu_custom_call.1} parent=1 // pred_check
      _
    $region79: #{tpu_custom_call.1} parent=1 // pred_check_branch
      %1768 = sbr.rel (0) target = $region81
    $region80: #{tpu_custom_call.1} parent=1 // pred_region
      _
    $region81: #{tpu_custom_call.1} parent=1 // pred_fallthru
      _
    // Predicated region
    $region82: #{tpu_custom_call.1} parent=1 // pred_check
      _
    $region83: #{tpu_custom_call.1} parent=1 // pred_check_branch
      %1770 = sbr.rel (0) target = $region85
    $region84: #{tpu_custom_call.1} parent=1 // pred_region
      _
    $region85: #{tpu_custom_call.1} parent=1 // pred_fallthru
      _
    %1771 = vsyncpa [#allocation8], 1
    %1772 = vsyncpa [#allocation10], 1
    %1773 = vsyncpa [#allocation13], 1

</llo_original>
